<compile_context>
chip_gen: v7x
topology: tpu7x:2x2x1
jax: 0.10.0
libtpu: 0.0.40
codegen_flags: <defaults>
</compile_context>

<pallas_src>
import functools
import math

import numpy as np
import jax
import jax.numpy as jnp
from jax.experimental import pallas as pl
from jax.experimental.pallas import tpu as pltpu


# ---------------------------------------------------------------------------
# Pallas kernels
# ---------------------------------------------------------------------------

def _ln_linear_kernel(x_ref, w_ref, b_ref, o_ref, *, eps):
    """out = LayerNorm(x) @ W + b, LN affine already folded into W/b."""
    x = x_ref[...].astype(jnp.float32)                         # (tm, Cin)
    n = x.shape[-1]
    s1 = jnp.sum(x, axis=-1, keepdims=True)
    s2 = jnp.sum(x * x, axis=-1, keepdims=True)
    mean = s1 / n
    var = s2 / n - mean * mean                                 # single-pass variance
    xn = (x - mean) * jax.lax.rsqrt(var + eps)
    acc = jnp.dot(xn, w_ref[...].astype(jnp.float32),
                  preferred_element_type=jnp.float32)
    o_ref[...] = (acc + b_ref[...].astype(jnp.float32)).astype(o_ref.dtype)


def _linear_kernel(x_ref, w_ref, b_ref, o_ref):
    x = x_ref[...].astype(jnp.float32)
    acc = jnp.dot(x, w_ref[...].astype(jnp.float32),
                  preferred_element_type=jnp.float32)
    o_ref[...] = (acc + b_ref[...].astype(jnp.float32)).astype(o_ref.dtype)


def _linear_residual_kernel(x_ref, w_ref, b_ref, r_ref, o_ref):
    x = x_ref[...].astype(jnp.float32)
    acc = jnp.dot(x, w_ref[...].astype(jnp.float32),
                  preferred_element_type=jnp.float32)
    acc = acc + b_ref[...].astype(jnp.float32) + r_ref[...].astype(jnp.float32)
    o_ref[...] = acc.astype(o_ref.dtype)


def _window_attn_kernel(q_ref, k_ref, v_ref, bias_ref, o_ref, *, scale, num_heads):
    """Attention for a batch of windows that share one (rel-pos + shift) bias."""
    q = q_ref[0].astype(jnp.float32) * scale                   # (tbh, N, hd)
    k = k_ref[0].astype(jnp.float32)
    v = v_ref[0].astype(jnp.float32)
    s = jnp.einsum("bnd,bmd->bnm", q, k, preferred_element_type=jnp.float32)
    tbh, n, _ = s.shape
    bias = bias_ref[0].astype(jnp.float32)                     # (nH, N, N)
    s = (s.reshape(tbh // num_heads, num_heads, n, n) + bias[None]).reshape(tbh, n, n)
    m = jnp.max(s, axis=-1, keepdims=True)
    p = jnp.exp(s - m)
    l = jnp.sum(p, axis=-1, keepdims=True)
    attn = p / l
    out = jnp.einsum("bnm,bmd->bnd", attn, v, preferred_element_type=jnp.float32)
    o_ref[0] = out.astype(o_ref.dtype)


def _patch_merging_kernel(top_ref, bot_ref, wt_ref, wb_ref, b_ref, o_ref, *, eps):
    """Fused 2x2 gather + LayerNorm(4C) + (4C -> 2C) reduction.

    top/bot hold the even/odd image rows; their last dim interleaves the two
    even/odd columns, i.e. top row channels = [x0 | x2], bottom = [x1 | x3].
    The channel permutation vs. PyTorch's [x0,x1,x2,x3] order is absorbed into
    the (already LN-affine-folded) weight slabs wt/wb in the wrapper.
    """
    top = top_ref[...].astype(jnp.float32)                     # (rb, 1, Wo, 2C)
    bot = bot_ref[...].astype(jnp.float32)
    rb, _, wo, c2 = top.shape
    top = top.reshape(rb * wo, c2)
    bot = bot.reshape(rb * wo, c2)
    c4 = 2.0 * c2
    s1 = jnp.sum(top, axis=-1, keepdims=True) + jnp.sum(bot, axis=-1, keepdims=True)
    s2 = (jnp.sum(top * top, axis=-1, keepdims=True)
          + jnp.sum(bot * bot, axis=-1, keepdims=True))
    mean = s1 / c4
    var = s2 / c4 - mean * mean
    inv = jax.lax.rsqrt(var + eps)
    acc = jnp.dot((top - mean) * inv, wt_ref[...].astype(jnp.float32),
                  preferred_element_type=jnp.float32)
    acc = acc + jnp.dot((bot - mean) * inv, wb_ref[...].astype(jnp.float32),
                        preferred_element_type=jnp.float32)
    o_ref[...] = (acc + b_ref[...].astype(jnp.float32)).astype(o_ref.dtype)


# ---------------------------------------------------------------------------
# Pallas wrappers
# ---------------------------------------------------------------------------

def _row_tile(m, target=256):
    """Largest MXU-friendly row tile (multiple of 8) up to target, or the full M."""
    return m if m <= target else target


def ln_linear(x, w_folded, b_folded, *, eps):
    m, cin = x.shape
    f = w_folded.shape[1]
    tm = _row_tile(m)
    return pl.pallas_call(
        functools.partial(_ln_linear_kernel, eps=eps),
        out_shape=jax.ShapeDtypeStruct((m, f), x.dtype),
        grid_spec=pltpu.PrefetchScalarGridSpec(
            num_scalar_prefetch=0,
            grid=(pl.cdiv(m, tm),),
            in_specs=[
                pl.BlockSpec((tm, cin), lambda i: (i, 0)),
                pl.BlockSpec((cin, f), lambda i: (0, 0)),
                pl.BlockSpec((1, f), lambda i: (0, 0)),
            ],
            out_specs=pl.BlockSpec((tm, f), lambda i: (i, 0)),
        ),
        compiler_params=pltpu.CompilerParams(dimension_semantics=("parallel",)),
    )(x, w_folded, b_folded.reshape(1, f))


def linear(x, w_t, b):
    m, cin = x.shape
    f = w_t.shape[1]
    tm = _row_tile(m)
    return pl.pallas_call(
        _linear_kernel,
        out_shape=jax.ShapeDtypeStruct((m, f), x.dtype),
        grid_spec=pltpu.PrefetchScalarGridSpec(
            num_scalar_prefetch=0,
            grid=(pl.cdiv(m, tm),),
            in_specs=[
                pl.BlockSpec((tm, cin), lambda i: (i, 0)),
                pl.BlockSpec((cin, f), lambda i: (0, 0)),
                pl.BlockSpec((1, f), lambda i: (0, 0)),
            ],
            out_specs=pl.BlockSpec((tm, f), lambda i: (i, 0)),
        ),
        compiler_params=pltpu.CompilerParams(dimension_semantics=("parallel",)),
    )(x, w_t, b.reshape(1, f))


def linear_residual(x, w_t, b, res):
    m, cin = x.shape
    f = w_t.shape[1]
    tm = _row_tile(m)
    return pl.pallas_call(
        _linear_residual_kernel,
        out_shape=jax.ShapeDtypeStruct((m, f), x.dtype),
        grid_spec=pltpu.PrefetchScalarGridSpec(
            num_scalar_prefetch=0,
            grid=(pl.cdiv(m, tm),),
            in_specs=[
                pl.BlockSpec((tm, cin), lambda i: (i, 0)),
                pl.BlockSpec((cin, f), lambda i: (0, 0)),
                pl.BlockSpec((1, f), lambda i: (0, 0)),
                pl.BlockSpec((tm, f), lambda i: (i, 0)),
            ],
            out_specs=pl.BlockSpec((tm, f), lambda i: (i, 0)),
        ),
        compiler_params=pltpu.CompilerParams(dimension_semantics=("parallel",)),
    )(x, w_t, b.reshape(1, f), res)


def window_attention(q, k, v, bias, *, scale, num_heads):
    """q/k/v: (nW, B*nH, N, hd), bias: (nW, nH, N, N) -> (nW, B*nH, N, hd)."""
    nw, bh, n, hd = q.shape
    imgs = bh // num_heads
    tb_imgs = max(1, min(imgs, max(1, 512 // max(1, num_heads * n))))
    tbh = tb_imgs * num_heads
    grid = (nw, pl.cdiv(bh, tbh))
    return pl.pallas_call(
        functools.partial(_window_attn_kernel, scale=scale, num_heads=num_heads),
        out_shape=jax.ShapeDtypeStruct((nw, bh, n, hd), q.dtype),
        grid_spec=pltpu.PrefetchScalarGridSpec(
            num_scalar_prefetch=0,
            grid=grid,
            in_specs=[
                pl.BlockSpec((1, tbh, n, hd), lambda w, j: (w, j, 0, 0)),
                pl.BlockSpec((1, tbh, n, hd), lambda w, j: (w, j, 0, 0)),
                pl.BlockSpec((1, tbh, n, hd), lambda w, j: (w, j, 0, 0)),
                pl.BlockSpec((1, num_heads, n, n), lambda w, j: (w, 0, 0, 0)),
            ],
            out_specs=pl.BlockSpec((1, tbh, n, hd), lambda w, j: (w, j, 0, 0)),
        ),
        compiler_params=pltpu.CompilerParams(
            dimension_semantics=("parallel", "parallel")),
    )(q, k, v, bias)


def _row_pair_tile(r, wo, target=256):
    """Row-pair tile for PatchMerging so that rb*Wo is a multiple of 8 (or full)."""
    rb = max(1, target // max(wo, 1))
    rb = min(rb, r)
    if rb >= r:
        return r
    step = 8 // math.gcd(wo, 8)
    rb = max(step, (rb // step) * step)
    return min(rb, r)


def patch_merging(x, H, W, gamma, beta, w_reduction, *, eps=1e-5):
    """PatchMerging downsample: (B, H*W, C) -> (B, ceil(H/2)*ceil(W/2), 2C)."""
    B, L, C = x.shape
    assert L == H * W, "input features has wrong size"
    xv = x.reshape(B, H, W, C)
    if (H % 2 == 1) or (W % 2 == 1):          # matches PyTorch PatchMerging
        xv = jnp.pad(xv, ((0, 0), (0, H % 2), (0, W % 2), (0, 0)))
    Hp, Wp = xv.shape[1], xv.shape[2]
    Ho, Wo = Hp // 2, Wp // 2
    R = B * Ho
    M = R * Wo
    C2 = 2 * C

    # Free view: rows are (image-row pairs); last dim interleaves (even/odd col, c).
    x5 = xv.reshape(R, 2, Wo, C2)

    # Fold LN affine into the reduction weight, absorb the channel permutation.
    wt = jnp.transpose(w_reduction)            # (4C, 2C), rows in [x0,x1,x2,x3] order
    w_f = gamma[:, None] * wt
    b_f = beta @ wt                            # (2C,)
    w_top = jnp.concatenate([w_f[0:C], w_f[2 * C:3 * C]], axis=0)      # [x0 | x2]
    w_bot = jnp.concatenate([w_f[C:2 * C], w_f[3 * C:4 * C]], axis=0)  # [x1 | x3]

    rb = _row_pair_tile(R, Wo)
    out = pl.pallas_call(
        functools.partial(_patch_merging_kernel, eps=eps),
        out_shape=jax.ShapeDtypeStruct((M, C2), x.dtype),
        grid_spec=pltpu.PrefetchScalarGridSpec(
            num_scalar_prefetch=0,
            grid=(pl.cdiv(R, rb),),
            in_specs=[
                pl.BlockSpec((rb, 1, Wo, C2), lambda i: (i, 0, 0, 0)),  # even rows
                pl.BlockSpec((rb, 1, Wo, C2), lambda i: (i, 1, 0, 0)),  # odd rows
                pl.BlockSpec((C2, C2), lambda i: (0, 0)),
                pl.BlockSpec((C2, C2), lambda i: (0, 0)),
                pl.BlockSpec((1, C2), lambda i: (0, 0)),
            ],
            out_specs=pl.BlockSpec((rb * Wo, C2), lambda i: (i, 0)),
        ),
        compiler_params=pltpu.CompilerParams(dimension_semantics=("parallel",)),
    )(x5, x5, w_top, w_bot, b_f.reshape(1, C2))
    return out.reshape(B, Ho * Wo, C2)


# ---------------------------------------------------------------------------
# Swin block / BasicLayer forward (Pallas-backed)
# ---------------------------------------------------------------------------

def _relative_position_index(window_size):
    ws = window_size
    coords = np.stack(np.meshgrid(np.arange(ws), np.arange(ws), indexing="ij"))
    coords = coords.reshape(2, -1)
    rel = coords[:, :, None] - coords[:, None, :]
    rel = rel.transpose(1, 2, 0).astype(np.int64)
    rel[:, :, 0] += ws - 1
    rel[:, :, 1] += ws - 1
    rel[:, :, 0] *= 2 * ws - 1
    return jnp.asarray(rel.sum(-1).astype(np.int32))          # (N, N)


def _create_attn_mask(H, W, window_size, shift_size):
    ws = window_size
    Hp = int(np.ceil(H / ws)) * ws
    Wp = int(np.ceil(W / ws)) * ws
    img_mask = np.zeros((Hp, Wp), dtype=np.float32)
    h_slices = (slice(0, -ws), slice(-ws, -shift_size), slice(-shift_size, None))
    w_slices = (slice(0, -ws), slice(-ws, -shift_size), slice(-shift_size, None))
    cnt = 0
    for h in h_slices:
        for w in w_slices:
            img_mask[h, w] = cnt
            cnt += 1
    mw = img_mask.reshape(Hp // ws, ws, Wp // ws, ws).transpose(0, 2, 1, 3)
    mw = mw.reshape(-1, ws * ws)
    am = mw[:, None, :] - mw[:, :, None]
    am = np.where(am != 0, -100.0, 0.0).astype(np.float32)
    return jnp.asarray(am)                                     # (nW, N, N)


def swin_block_forward(x, H, W, p, rel_index, *, window_size, shift, attn_mask, eps):
    B, L, C = x.shape
    assert L == H * W, "input features has wrong size"
    ws = window_size
    num_heads = p["num_heads"]
    hd = C // num_heads
    scale = hd ** -0.5
    shortcut = x.reshape(B * L, C)

    # fused norm1 + qkv (LN affine folded into the qkv weight)
    w_qkv = jnp.transpose(p["qkv_w"])                          # (C, 3C)
    w_qkv_f = p["norm1_g"][:, None] * w_qkv
    b_qkv_f = p["norm1_b"] @ w_qkv + p["qkv_b"]
    qkv = ln_linear(shortcut, w_qkv_f, b_qkv_f, eps=eps)       # (B*L, 3C)
    qkv = qkv.reshape(B, H, W, 3 * C)

    # pad to window multiples; padded tokens equal qkv(0) = qkv bias (as in PyTorch)
    pad_r = (ws - W % ws) % ws
    pad_b = (ws - H % ws) % ws
    Hp, Wp = H + pad_b, W + pad_r
    if pad_r > 0 or pad_b > 0:
        qkv = jnp.pad(qkv, ((0, 0), (0, pad_b), (0, pad_r), (0, 0)))
        rows = jnp.arange(Hp)[:, None]
        cols = jnp.arange(Wp)[None, :]
        is_pad = (rows >= H) | (cols >= W)
        qkv = jnp.where(is_pad[None, :, :, None], p["qkv_b"][None, None, None, :], qkv)

    # cyclic shift + window partition + head split (layout glue)
    if shift > 0:
        qkv = jnp.roll(qkv, shift=(-shift, -shift), axis=(1, 2))
    nWh, nWw = Hp // ws, Wp // ws
    nW, N = nWh * nWw, ws * ws
    qkv = qkv.reshape(B, nWh, ws, nWw, ws, 3, num_heads, hd)
    qkv = qkv.transpose(5, 1, 3, 0, 6, 2, 4, 7)                # (3,nWh,nWw,B,nH,ws,ws,hd)
    qkv = qkv.reshape(3, nW, B * num_heads, N, hd)
    q, k, v = qkv[0], qkv[1], qkv[2]

    # additive bias: relative position bias (+ shift mask)
    rel = p["rel_bias_table"][rel_index.reshape(-1)]
    rel = rel.reshape(N, N, num_heads).transpose(2, 0, 1)      # (nH, N, N)
    if shift > 0 and attn_mask is not None:
        bias = rel[None] + attn_mask[:, None]                  # (nW, nH, N, N)
    else:
        bias = jnp.broadcast_to(rel[None], (nW, num_heads, N, N))

    attn = window_attention(q, k, v, bias, scale=scale, num_heads=num_heads)

    # window reverse, un-shift, un-pad
    attn = attn.reshape(nWh, nWw, B, num_heads, ws, ws, hd)
    attn = attn.transpose(2, 0, 4, 1, 5, 3, 6)                 # (B,nWh,ws,nWw,ws,nH,hd)
    attn = attn.reshape(B, Hp, Wp, C)
    if shift > 0:
        attn = jnp.roll(attn, shift=(shift, shift), axis=(1, 2))
    if pad_r > 0 or pad_b > 0:
        attn = attn[:, :H, :W, :]
    attn = attn.reshape(B * L, C)

    # output projection + residual 1
    proj = linear(attn, jnp.transpose(p["proj_w"]), p["proj_b"])
    x1 = shortcut + proj

    # fused norm2 + fc1, GELU, fused fc2 + residual 2
    w_fc1 = jnp.transpose(p["fc1_w"])                          # (C, hidden)
    w_fc1_f = p["norm2_g"][:, None] * w_fc1
    b_fc1_f = p["norm2_b"] @ w_fc1 + p["fc1_b"]
    h = ln_linear(x1, w_fc1_f, b_fc1_f, eps=eps)
    # TODO(synk): fuse the exact (erf-based) GELU into the fc1/fc2 kernels once
    # lax.erf lowering inside Mosaic is confirmed; kept in XLA for portability.
    h = jax.nn.gelu(h, approximate=False)
    out = linear_residual(h, jnp.transpose(p["fc2_w"]), p["fc2_b"], x1)
    return out.reshape(B, L, C)


def basic_layer_forward(x, H, W, params, *, window_size, eps=1e-5):
    depth = len(params["blocks"])
    shift_size = window_size // 2
    attn_mask = None
    if depth > 1 and shift_size > 0:
        attn_mask = _create_attn_mask(H, W, window_size, shift_size)
    for i, blk in enumerate(params["blocks"]):
        shift = 0 if i % 2 == 0 else shift_size
        x = swin_block_forward(x, H, W, blk, params["rel_index"],
                               window_size=window_size, shift=shift,
                               attn_mask=attn_mask, eps=eps)
    if params.get("downsample") is not None:
        ds = params["downsample"]
        x = patch_merging(x, H, W, ds["norm_g"], ds["norm_b"], ds["red_w"], eps=eps)
        H, W = (H + 1) // 2, (W + 1) // 2
    return x, H, W


# ---------------------------------------------------------------------------
# Pure-JAX reference mirroring the PyTorch forward
# ---------------------------------------------------------------------------

def _layernorm_ref(x, g, b, eps):
    mu = jnp.mean(x, -1, keepdims=True)
    var = jnp.mean((x - mu) ** 2, -1, keepdims=True)
    return (x - mu) / jnp.sqrt(var + eps) * g + b


def _window_partition_ref(x, ws):
    B, H, W, C = x.shape
    x = x.reshape(B, H // ws, ws, W // ws, ws, C).transpose(0, 1, 3, 2, 4, 5)
    return x.reshape(-1, ws, ws, C)


def _window_reverse_ref(windows, ws, H, W):
    B = windows.shape[0] // (H * W // ws // ws)
    x = windows.reshape(B, H // ws, W // ws, ws, ws, -1).transpose(0, 1, 3, 2, 4, 5)
    return x.reshape(B, H, W, -1)


def _swin_block_ref(x, H, W, p, rel_index, window_size, shift, attn_mask, eps):
    B, L, C = x.shape
    ws = window_size
    nH = p["num_heads"]
    hd = C // nH
    shortcut = x
    xn = _layernorm_ref(x, p["norm1_g"], p["norm1_b"], eps).reshape(B, H, W, C)
    pad_r = (ws - W % ws) % ws
    pad_b = (ws - H % ws) % ws
    xn = jnp.pad(xn, ((0, 0), (0, pad_b), (0, pad_r), (0, 0)))
    Hp, Wp = H + pad_b, W + pad_r
    if shift > 0:
        xs = jnp.roll(xn, shift=(-shift, -shift), axis=(1, 2))
        mask = attn_mask
    else:
        xs = xn
        mask = None
    xw = _window_partition_ref(xs, ws).reshape(-1, ws * ws, C)
    B_, N, _ = xw.shape
    qkv = xw @ p["qkv_w"].T + p["qkv_b"]
    qkv = qkv.reshape(B_, N, 3, nH, hd).transpose(2, 0, 3, 1, 4)
    q, k, v = qkv[0], qkv[1], qkv[2]
    q = q * (hd ** -0.5)
    attn = jnp.matmul(q, jnp.swapaxes(k, -2, -1))
    rel = p["rel_bias_table"][rel_index.reshape(-1)].reshape(N, N, nH).transpose(2, 0, 1)
    attn = attn + rel[None]
    if mask is not None:
        nW = mask.shape[0]
        attn = attn.reshape(B_ // nW, nW, nH, N, N) + mask[None, :, None]
        attn = attn.reshape(-1, nH, N, N)
    attn = jax.nn.softmax(attn, axis=-1)
    out = jnp.matmul(attn, v).transpose(0, 2, 1, 3).reshape(B_, N, C)
    out = out @ p["proj_w"].T + p["proj_b"]
    out = _window_reverse_ref(out.reshape(-1, ws, ws, C), ws, Hp, Wp)
    if shift > 0:
        out = jnp.roll(out, shift=(shift, shift), axis=(1, 2))
    out = out[:, :H, :W, :].reshape(B, L, C)
    x = shortcut + out
    h = _layernorm_ref(x, p["norm2_g"], p["norm2_b"], eps)
    h = h @ p["fc1_w"].T + p["fc1_b"]
    h = jax.nn.gelu(h, approximate=False)
    h = h @ p["fc2_w"].T + p["fc2_b"]
    return x + h


def _patch_merging_ref(x, H, W, gamma, beta, w_red, eps):
    B, L, C = x.shape
    xv = x.reshape(B, H, W, C)
    if (H % 2 == 1) or (W % 2 == 1):
        xv = jnp.pad(xv, ((0, 0), (0, H % 2), (0, W % 2), (0, 0)))
    x0 = xv[:, 0::2, 0::2]
    x1 = xv[:, 1::2, 0::2]
    x2 = xv[:, 0::2, 1::2]
    x3 = xv[:, 1::2, 1::2]
    xm = jnp.concatenate([x0, x1, x2, x3], -1).reshape(B, -1, 4 * C)
    xm = _layernorm_ref(xm, gamma, beta, eps)
    return xm @ w_red.T


def _basic_layer_ref(x, H, W, params, *, window_size, eps=1e-5):
    depth = len(params["blocks"])
    shift_size = window_size // 2
    attn_mask = None
    if depth > 1 and shift_size > 0:
        attn_mask = _create_attn_mask(H, W, window_size, shift_size)
    for i, p in enumerate(params["blocks"]):
        shift = 0 if i % 2 == 0 else shift_size
        x = _swin_block_ref(x, H, W, p, params["rel_index"], window_size, shift,
                            attn_mask, eps)
    if params.get("downsample") is not None:
        ds = params["downsample"]
        x = _patch_merging_ref(x, H, W, ds["norm_g"], ds["norm_b"], ds["red_w"], eps)
        H, W = (H + 1) // 2, (W + 1) // 2
    return x, H, W


# ---------------------------------------------------------------------------
# Parameter construction + self-test
# ---------------------------------------------------------------------------

def init_params(key, dim, depth, num_heads, window_size, mlp_ratio, with_downsample):
    hidden = int(dim * mlp_ratio)
    n_rel = (2 * window_size - 1) ** 2
    blocks = []
    for _ in range(depth):
        key, *ks = jax.random.split(key, 14)
        blocks.append(dict(
            num_heads=num_heads,
            norm1_g=1.0 + 0.02 * jax.random.normal(ks[0], (dim,), jnp.float32),
            norm1_b=0.02 * jax.random.normal(ks[1], (dim,), jnp.float32),
            qkv_w=0.05 * jax.random.normal(ks[2], (3 * dim, dim), jnp.float32),
            qkv_b=0.02 * jax.random.normal(ks[3], (3 * dim,), jnp.float32),
            rel_bias_table=0.02 * jax.random.normal(ks[4], (n_rel, num_heads), jnp.float32),
            proj_w=0.05 * jax.random.normal(ks[5], (dim, dim), jnp.float32),
            proj_b=0.02 * jax.random.normal(ks[6], (dim,), jnp.float32),
            norm2_g=1.0 + 0.02 * jax.random.normal(ks[7], (dim,), jnp.float32),
            norm2_b=0.02 * jax.random.normal(ks[8], (dim,), jnp.float32),
            fc1_w=0.05 * jax.random.normal(ks[9], (hidden, dim), jnp.float32),
            fc1_b=0.02 * jax.random.normal(ks[10], (hidden,), jnp.float32),
            fc2_w=0.05 * jax.random.normal(ks[11], (dim, hidden), jnp.float32),
            fc2_b=0.02 * jax.random.normal(ks[12], (dim,), jnp.float32),
        ))
    params = dict(blocks=blocks, rel_index=_relative_position_index(window_size))
    if with_downsample:
        key, k1, k2, k3 = jax.random.split(key, 4)
        params["downsample"] = dict(
            norm_g=1.0 + 0.02 * jax.random.normal(k1, (4 * dim,), jnp.float32),
            norm_b=0.02 * jax.random.normal(k2, (4 * dim,), jnp.float32),
            red_w=0.05 * jax.random.normal(k3, (2 * dim, 4 * dim), jnp.float32),
        )
    else:
        params["downsample"] = None
    return params


if __name__ == "__main__":
    jax.config.update("jax_default_matmul_precision", "highest")

    key = jax.random.PRNGKey(0)
    B, H, W = 2, 16, 16
    dim, depth, num_heads, window_size, mlp_ratio = 32, 2, 2, 4, 4.0

    key, kx = jax.random.split(key)
    x = jax.random.normal(kx, (B, H * W, dim), dtype=jnp.float32)
    params = init_params(key, dim, depth, num_heads, window_size, mlp_ratio,
                         with_downsample=True)

    out, H2, W2 = basic_layer_forward(x, H, W, params, window_size=window_size)
    out = jax.block_until_ready(out)

    ref, Hr, Wr = _basic_layer_ref(x, H, W, params, window_size=window_size)
    assert out.shape == ref.shape == (B, (H // 2) * (W // 2), 2 * dim), out.shape
    assert (H2, W2) == (Hr, Wr) == ((H + 1) // 2, (W + 1) // 2)
    assert jnp.allclose(out, ref, atol=2e-3, rtol=2e-3), "mismatch vs reference"

    print("KERNEL_OK")
</pallas_src>

<mosaic_0001>
module attributes {stable_mosaic.version = 11 : i64} {
  func.func @_ln_linear_kernel(%arg0: i32, %arg1: memref<256x32xf32, #tpu.memory_space<vmem>>, %arg2: memref<32x96xf32, #tpu.memory_space<vmem>>, %arg3: memref<1x96xf32, #tpu.memory_space<vmem>>, %arg4: memref<256x96xf32, #tpu.memory_space<vmem>>) attributes {dimension_semantics = [#tpu.dimension_semantics<parallel>], iteration_bounds = array<i64: 2>, scalar_prefetch = 0 : i64, scratch_operands = 0 : i64, tpu.core_type = #tpu.core_type<tc>, window_params = [{transform_indices = @transform_0, window_bounds = array<i64: 256, 32>}, {pipeline_mode = #tpu.pipeline_mode<synchronous>, transform_indices = @transform_1, window_bounds = array<i64: 32, 96>}, {pipeline_mode = #tpu.pipeline_mode<synchronous>, transform_indices = @transform_2, window_bounds = array<i64: 1, 96>}, {transform_indices = @transform_3, window_bounds = array<i64: 256, 96>}]} {
    %c0 = arith.constant 0 : index
    %c0_0 = arith.constant 0 : index
    %0 = vector.load %arg1[%c0, %c0_0] : memref<256x32xf32, #tpu.memory_space<vmem>>, vector<256x32xf32>
    %cst = arith.constant dense<0.000000e+00> : vector<256xf32>
    %1 = vector.multi_reduction <add>, %0, %cst [1] : vector<256x32xf32> to vector<256xf32>
    %2 = vector.shape_cast %1 : vector<256xf32> to vector<256x1xf32>
    %3 = arith.mulf %0, %0 : vector<256x32xf32>
    %cst_1 = arith.constant dense<0.000000e+00> : vector<256xf32>
    %4 = vector.multi_reduction <add>, %3, %cst_1 [1] : vector<256x32xf32> to vector<256xf32>
    %5 = vector.shape_cast %4 : vector<256xf32> to vector<256x1xf32>
    %cst_2 = arith.constant 3.200000e+01 : f32
    %6 = vector.broadcast %cst_2 : f32 to vector<256x1xf32>
    %7 = arith.divf %2, %6 : vector<256x1xf32>
    %cst_3 = arith.constant 3.200000e+01 : f32
    %8 = vector.broadcast %cst_3 : f32 to vector<256x1xf32>
    %9 = arith.divf %5, %8 : vector<256x1xf32>
    %10 = arith.mulf %7, %7 : vector<256x1xf32>
    %11 = arith.subf %9, %10 : vector<256x1xf32>
    %12 = vector.broadcast %7 : vector<256x1xf32> to vector<256x32xf32>
    %13 = arith.subf %0, %12 : vector<256x32xf32>
    %cst_4 = arith.constant 9.99999974E-6 : f32
    %14 = vector.broadcast %cst_4 : f32 to vector<256x1xf32>
    %15 = arith.addf %11, %14 : vector<256x1xf32>
    %16 = math.rsqrt %15 : vector<256x1xf32>
    %17 = vector.broadcast %16 : vector<256x1xf32> to vector<256x32xf32>
    %18 = arith.mulf %13, %17 : vector<256x32xf32>
    %c0_5 = arith.constant 0 : index
    %c0_6 = arith.constant 0 : index
    %19 = vector.load %arg2[%c0_5, %c0_6] : memref<32x96xf32, #tpu.memory_space<vmem>>, vector<32x96xf32>
    %cst_7 = arith.constant dense<0.000000e+00> : vector<256x96xf32>
    %20 = tpu.matmul %18, %19, %cst_7 {dimension_numbers = #tpu.dot_dimension_numbers<[1], [0], [0], [1], [0, 0, 1, 1], [], []>, precision = #tpu.contract_precision<fp32>} : vector<256x32xf32>, vector<32x96xf32>, vector<256x96xf32> -> vector<256x96xf32>
    %c0_8 = arith.constant 0 : index
    %c0_9 = arith.constant 0 : index
    %21 = vector.load %arg3[%c0_8, %c0_9] : memref<1x96xf32, #tpu.memory_space<vmem>>, vector<1x96xf32>
    %22 = vector.broadcast %21 : vector<1x96xf32> to vector<256x96xf32>
    %23 = arith.addf %20, %22 : vector<256x96xf32>
    %c0_10 = arith.constant 0 : index
    %c0_11 = arith.constant 0 : index
    %24 = vector.load %arg4[%c0_10, %c0_11] : memref<256x96xf32, #tpu.memory_space<vmem>>, vector<256x96xf32>
    tpu.vector_store %arg4[%c0_10, %c0_11], %23 {strides = array<i32>} : memref<256x96xf32, #tpu.memory_space<vmem>>, vector<256x96xf32>,
    return
  }
  func.func @transform_0(%arg0: i32) -> (i32, i32) {
    %c0_i32 = arith.constant 0 : i32
    %c0_i32_0 = arith.constant 0 : i32
    return %arg0, %c0_i32 : i32, i32
  }
  func.func @transform_1(%arg0: i32) -> (i32, i32) {
    %c0_i32 = arith.constant 0 : i32
    %c0_i32_0 = arith.constant 0 : i32
    %c0_i32_1 = arith.constant 0 : i32
    return %c0_i32, %c0_i32_0 : i32, i32
  }
  func.func @transform_2(%arg0: i32) -> (i32, i32) {
    %c0_i32 = arith.constant 0 : i32
    %c0_i32_0 = arith.constant 0 : i32
    %c0_i32_1 = arith.constant 0 : i32
    return %c0_i32, %c0_i32_0 : i32, i32
  }
  func.func @transform_3(%arg0: i32) -> (i32, i32) {
    %c0_i32 = arith.constant 0 : i32
    %c0_i32_0 = arith.constant 0 : i32
    return %arg0, %c0_i32 : i32, i32
  }
}

</mosaic_0001>

<llo_original>
// kernel: tpu_custom_call.1
$region0: #{tpu_custom_call.1}
  #allocation0 [shape = 'u32[]', space=smem, size = 0x4, offset = 0x4, fixed_abs, tag = 'smem constant byte address 0x4 - core index']
  #allocation1 [shape = 'u32[144,128]{1,0:T(1,128)}', space=vmem, size = 0x12000, scoped, tag = 'internal scratch']
  %s0 = inlined_call_operand.vmem [shape: f32[512,32], index: 0, kind: input, shape index: {}]
  %s1 = inlined_call_operand.vmem [shape: f32[32,96], index: 1, kind: input, shape index: {}]
  %s2 = inlined_call_operand.vmem [shape: f32[1,96], index: 2, kind: input, shape index: {}]
  %s3 = inlined_call_operand.vmem [shape: f32[512,96], index: 3, kind: output, shape index: {}]
  %s4 = sld [smem:[#allocation0]]
  $region45: #{tpu_custom_call.1} parent=0
    _
  %s6 = ssub.s32 1, %s4
  %s7 = scalar_select 0, %s6, %s4
  loop: start=0, step=1, limit=4
  $region2: #{tpu_custom_call.1} parent=0 // loop_pre_header
    _
  $region3: #{tpu_custom_call.1} parent=0 // loop_header
    %s9 = sphi 0, %s13
    %p10 = scmp.ge.s32.totalorder %s9, 4
    %s19 = sphi 0, %s21
    %s22 = sphi 0, %s19
    %s23 = sphi 0, %s22
    %s39 = sphi 0, %s23
    %s43 = sphi 0, %s43
    %s45 = sphi 0, %s43
    %s46 = sphi 0, %s45
    %s60 = sphi 0, %s46
    %s64 = sphi 0, %s64
    %s66 = sphi 0, %s64
    %s67 = sphi 0, %s66
    %s81 = sphi 0, %s67
    %s87 = sphi 0, %s89
    %s90 = sphi 0, %s87
    %s91 = sphi 0, %s90
    %s107 = sphi 0, %s91
  $region4: #{tpu_custom_call.1} parent=0 // loop_header_branch
    %12 = sbr.rel (%p10) target = $region8
  $region5: #{tpu_custom_call.1} parent=0 // loop_body
    %s14 = ssub.s32 %s9, 1
    %s15 = ssub.s32 %s9, 2
    %s16 = sadd.s32 %s9, 1
    %s17 = ssub.s32 %s9, %s16
    %p18 = scmp.eq.s32.totalorder %s17, 0
    %s20 = sadd.s32 %s19, 1
    %s21 = scalar_select %p18, %s19, %s20
    %p24 = pneg %p18
    %p25 = scmp.eq.s32.totalorder %s9, 1
    %p26 = por %p24, %p25
    %p27 = scmp.ne.s32.totalorder %s19, %s22
    %p28 = scmp.eq.s32.totalorder %s9, 0
    %p29 = por %p27, %p28
    %p30 = scmp.ne.s32.totalorder %s19, %s22
    %p31 = scmp.eq.s32.totalorder %s14, 1
    %p32 = por %p30, %p31
    %p33 = scmp.ne.s32.totalorder %s22, %s23
    %p34 = scmp.eq.s32.totalorder %s14, 0
    %p35 = por %p33, %p34
    %p36 = scmp.ne.s32.totalorder %s22, %s23
    %p37 = scmp.eq.s32.totalorder %s15, 1
    %p38 = por %p36, %p37
    %p40 = scmp.ne.s32.totalorder %s23, %s39
    %p41 = scmp.eq.s32.totalorder %s15, 0
    %p42 = por %p40, %p41
    %s44 = sadd.s32 %s43, 1
    %p47 = scmp.eq.s32.totalorder %s9, 1
    %p48 = scmp.ne.s32.totalorder %s43, %s45
    %p49 = scmp.eq.s32.totalorder %s9, 0
    %p50 = por %p48, %p49
    %p51 = scmp.ne.s32.totalorder %s43, %s45
    %p52 = scmp.eq.s32.totalorder %s14, 1
    %p53 = por %p51, %p52
    %p54 = scmp.ne.s32.totalorder %s45, %s46
    %p55 = scmp.eq.s32.totalorder %s14, 0
    %p56 = por %p54, %p55
    %p57 = scmp.ne.s32.totalorder %s45, %s46
    %p58 = scmp.eq.s32.totalorder %s15, 1
    %p59 = por %p57, %p58
    %p61 = scmp.ne.s32.totalorder %s46, %s60
    %p62 = scmp.eq.s32.totalorder %s15, 0
    %p63 = por %p61, %p62
    %s65 = sadd.s32 %s64, 1
    %p68 = scmp.eq.s32.totalorder %s9, 1
    %p69 = scmp.ne.s32.totalorder %s64, %s66
    %p70 = scmp.eq.s32.totalorder %s9, 0
    %p71 = por %p69, %p70
    %p72 = scmp.ne.s32.totalorder %s64, %s66
    %p73 = scmp.eq.s32.totalorder %s14, 1
    %p74 = por %p72, %p73
    %p75 = scmp.ne.s32.totalorder %s66, %s67
    %p76 = scmp.eq.s32.totalorder %s14, 0
    %p77 = por %p75, %p76
    %p78 = scmp.ne.s32.totalorder %s66, %s67
    %p79 = scmp.eq.s32.totalorder %s15, 1
    %p80 = por %p78, %p79
    %p82 = scmp.ne.s32.totalorder %s67, %s81
    %p83 = scmp.eq.s32.totalorder %s15, 0
    %p84 = por %p82, %p83
    %s85 = ssub.s32 %s9, %s16
    %p86 = scmp.eq.s32.totalorder %s85, 0
    %s88 = sadd.s32 %s87, 1
    %s89 = scalar_select %p86, %s87, %s88
    %p92 = pneg %p86
    %p93 = scmp.eq.s32.totalorder %s9, 1
    %p94 = por %p92, %p93
    %p95 = scmp.ne.s32.totalorder %s87, %s90
    %p96 = scmp.eq.s32.totalorder %s9, 0
    %p97 = por %p95, %p96
    %p98 = scmp.ne.s32.totalorder %s87, %s90
    %p99 = scmp.eq.s32.totalorder %s14, 1
    %p100 = por %p98, %p99
    %p101 = scmp.ne.s32.totalorder %s90, %s91
    %p102 = scmp.eq.s32.totalorder %s14, 0
    %p103 = por %p101, %p102
    %p104 = scmp.ne.s32.totalorder %s90, %s91
    %p105 = scmp.eq.s32.totalorder %s15, 1
    %p106 = por %p104, %p105
    %p108 = scmp.ne.s32.totalorder %s91, %s107
    %p109 = scmp.eq.s32.totalorder %s15, 0
    %p110 = por %p108, %p109
    %p111 = scmp.le.s32.totalorder 1, %s9
    %p112 = scmp.lt.s32.totalorder %s9, 3
    %p113 = pnand %p111, %p112
    %p114 = pneg %p113
    // Predicated region
    $region9: #{tpu_custom_call.1} parent=5 // pred_check
      _
    $region10: #{tpu_custom_call.1} parent=5 // pred_check_branch
      %116 = sbr.rel (%p113) target = $region12
    $region11: #{tpu_custom_call.1} parent=5 // pred_region
      %s117 = ssub.s32 %s9, 1
      // Predicated region
      $region13: #{tpu_custom_call.1} parent=11 // pred_check
        %p118 = pneg %p56
      $region14: #{tpu_custom_call.1} parent=11 // pred_check_branch
        %120 = sbr.rel (%p118) target = $region16
      $region15: #{tpu_custom_call.1} parent=11 // pred_region
        _
      $region16: #{tpu_custom_call.1} parent=11 // pred_fallthru
        _
      // Predicated region
      $region17: #{tpu_custom_call.1} parent=11 // pred_check
        %p121 = pneg %p77
      $region18: #{tpu_custom_call.1} parent=11 // pred_check_branch
        %123 = sbr.rel (%p121) target = $region20
      $region19: #{tpu_custom_call.1} parent=11 // pred_region
        _
      $region20: #{tpu_custom_call.1} parent=11 // pred_fallthru
        _
    $region12: #{tpu_custom_call.1} parent=5 // pred_fallthru
      _
    %p124 = scmp.lt.s32.totalorder %s9, 2
    // Predicated region
    $region21: #{tpu_custom_call.1} parent=5 // pred_check
      %p125 = pneg %p124
    $region22: #{tpu_custom_call.1} parent=5 // pred_check_branch
      %127 = sbr.rel (%p125) target = $region24
    $region23: #{tpu_custom_call.1} parent=5 // pred_region
      // Predicated region
      $region25: #{tpu_custom_call.1} parent=23 // pred_check
        %p128 = pneg %p29
      $region26: #{tpu_custom_call.1} parent=23 // pred_check_branch
        %130 = sbr.rel (%p128) target = $region28
      $region27: #{tpu_custom_call.1} parent=23 // pred_region
        %s131 = smul.u32 32, %s9
        %p132 = scmp.lt.s32.totalorder %s131, 63
        %s133 = scalar_select %p132, %s131, 63
        %s134 = smul.addr %s133, 8
        %s135 = scalar_lea.vmem %s0, %s134
        %s136 = smul.u32 32, %s9
      $region28: #{tpu_custom_call.1} parent=23 // pred_fallthru
        _
    $region24: #{tpu_custom_call.1} parent=5 // pred_fallthru
      _
    %p137 = scmp.le.s32.totalorder 1, %s9
    %p138 = scmp.lt.s32.totalorder %s9, 3
    %p139 = pnand %p137, %p138
    %p140 = pneg %p139
    // Predicated region
    $region29: #{tpu_custom_call.1} parent=5 // pred_check
      _
    $region30: #{tpu_custom_call.1} parent=5 // pred_check_branch
      %142 = sbr.rel (%p139) target = $region32
    $region31: #{tpu_custom_call.1} parent=5 // pred_region
      %s143 = ssub.s32 %s9, 1
      %s144 = smul.u32 32, %s14
      %p145 = scmp.lt.s32.totalorder %s144, 63
      %s146 = scalar_select %p145, %s144, 63
      %s147 = smul.addr %s146, 8
      %s148 = scalar_lea.vmem %s0, %s147
      %p149 = pneg %p35
      %p150 = pneg %p32
      %p151 = pneg %p56
      %p152 = pneg %p53
      %p153 = pneg %p77
      %p154 = pneg %p74
      %p155 = pneg %p103
      %p156 = pneg %p100
      %s157 = smul.u32 32, %s14
      %p158 = scmp.lt.s32.totalorder %s157, 63
      %s159 = scalar_select %p158, %s157, 63
      %s160 = smul.addr %s159, 8
      %s161 = scalar_lea.vmem %s3, %s160
      %s162 = smul.u32 32, %s14
      %p163 = scmp.lt.s32.totalorder %s162, 63
      %s164 = scalar_select %p163, %s162, 63
      %s165 = smul.addr %s164, 8
      %s166 = scalar_lea.vmem %s0, %s165
      %s167 = smul.u32 32, %s14
      %s168 = smul.u32 32, %s14
      %p169 = scmp.lt.s32.totalorder %s168, 63
      %s170 = scalar_select %p169, %s168, 63
      %s171 = smul.addr %s170, 8
      %s172 = scalar_lea.vmem %s3, %s171
      %s173 = smul.u32 32, %s14
      %v174 = vld [vmem:[%s166] sm:$0xff]
      %v175 = vld [vmem:[%s166 + $0x8] sm:$0xff]
      %v176 = vld [vmem:[%s166 + $0x10] sm:$0xff]
      %v177 = vld [vmem:[%s166 + $0x18] sm:$0xff]
      %v178 = vld [vmem:[%s166 + $0x20] sm:$0xff]
      %v179 = vld [vmem:[%s166 + $0x28] sm:$0xff]
      %v180 = vld [vmem:[%s166 + $0x30] sm:$0xff]
      %v181 = vld [vmem:[%s166 + $0x38] sm:$0xff]
      %v182 = vld [vmem:[%s166 + $0x40] sm:$0xff]
      %v183 = vld [vmem:[%s166 + $0x48] sm:$0xff]
      %v184 = vld [vmem:[%s166 + $0x50] sm:$0xff]
      %v185 = vld [vmem:[%s166 + $0x58] sm:$0xff]
      %v186 = vld [vmem:[%s166 + $0x60] sm:$0xff]
      %v187 = vld [vmem:[%s166 + $0x68] sm:$0xff]
      %v188 = vld [vmem:[%s166 + $0x70] sm:$0xff]
      %v189 = vld [vmem:[%s166 + $0x78] sm:$0xff]
      %v190 = vld [vmem:[%s166 + $0x80] sm:$0xff]
      %v191 = vld [vmem:[%s166 + $0x88] sm:$0xff]
      %v192 = vld [vmem:[%s166 + $0x90] sm:$0xff]
      %v193 = vld [vmem:[%s166 + $0x98] sm:$0xff]
      %v194 = vld [vmem:[%s166 + $0xa0] sm:$0xff]
      %v195 = vld [vmem:[%s166 + $0xa8] sm:$0xff]
      %v196 = vld [vmem:[%s166 + $0xb0] sm:$0xff]
      %v197 = vld [vmem:[%s166 + $0xb8] sm:$0xff]
      %v198 = vld [vmem:[%s166 + $0xc0] sm:$0xff]
      %v199 = vld [vmem:[%s166 + $0xc8] sm:$0xff]
      %v200 = vld [vmem:[%s166 + $0xd0] sm:$0xff]
      %v201 = vld [vmem:[%s166 + $0xd8] sm:$0xff]
      %v202 = vld [vmem:[%s166 + $0xe0] sm:$0xff]
      %v203 = vld [vmem:[%s166 + $0xe8] sm:$0xff]
      %v204 = vld [vmem:[%s166 + $0xf0] sm:$0xff]
      %v205 = vld [vmem:[%s166 + $0xf8] sm:$0xff]
      %vm206 = vcmask 261120
      %v207 = vsel %vm206, %v174, 0.0
      %208 = vadd.xlane.f32.xlu0 %v207
      %v209 = vpop.xlane.xlu0 %208
      %v210 = vsel %vm206, %v175, 0.0
      %211 = vadd.xlane.f32.xlu0 %v210
      %v212 = vpop.xlane.xlu0 %211
      %v213 = vsel %vm206, %v176, 0.0
      %214 = vadd.xlane.f32.xlu0 %v213
      %v215 = vpop.xlane.xlu0 %214
      %v216 = vsel %vm206, %v177, 0.0
      %217 = vadd.xlane.f32.xlu0 %v216
      %v218 = vpop.xlane.xlu0 %217
      %v219 = vsel %vm206, %v178, 0.0
      %220 = vadd.xlane.f32.xlu0 %v219
      %v221 = vpop.xlane.xlu0 %220
      %v222 = vsel %vm206, %v179, 0.0
      %223 = vadd.xlane.f32.xlu0 %v222
      %v224 = vpop.xlane.xlu0 %223
      %v225 = vsel %vm206, %v180, 0.0
      %226 = vadd.xlane.f32.xlu0 %v225
      %v227 = vpop.xlane.xlu0 %226
      %v228 = vsel %vm206, %v181, 0.0
      %229 = vadd.xlane.f32.xlu0 %v228
      %v230 = vpop.xlane.xlu0 %229
      %v231 = vsel %vm206, %v182, 0.0
      %232 = vadd.xlane.f32.xlu0 %v231
      %v233 = vpop.xlane.xlu0 %232
      %v234 = vsel %vm206, %v183, 0.0
      %235 = vadd.xlane.f32.xlu0 %v234
      %v236 = vpop.xlane.xlu0 %235
      %v237 = vsel %vm206, %v184, 0.0
      %238 = vadd.xlane.f32.xlu0 %v237
      %v239 = vpop.xlane.xlu0 %238
      %v240 = vsel %vm206, %v185, 0.0
      %241 = vadd.xlane.f32.xlu0 %v240
      %v242 = vpop.xlane.xlu0 %241
      %v243 = vsel %vm206, %v186, 0.0
      %244 = vadd.xlane.f32.xlu0 %v243
      %v245 = vpop.xlane.xlu0 %244
      %v246 = vsel %vm206, %v187, 0.0
      %247 = vadd.xlane.f32.xlu0 %v246
      %v248 = vpop.xlane.xlu0 %247
      %v249 = vsel %vm206, %v188, 0.0
      %250 = vadd.xlane.f32.xlu0 %v249
      %v251 = vpop.xlane.xlu0 %250
      %v252 = vsel %vm206, %v189, 0.0
      %253 = vadd.xlane.f32.xlu0 %v252
      %v254 = vpop.xlane.xlu0 %253
      %v255 = vsel %vm206, %v190, 0.0
      %256 = vadd.xlane.f32.xlu0 %v255
      %v257 = vpop.xlane.xlu0 %256
      %v258 = vsel %vm206, %v191, 0.0
      %259 = vadd.xlane.f32.xlu0 %v258
      %v260 = vpop.xlane.xlu0 %259
      %v261 = vsel %vm206, %v192, 0.0
      %262 = vadd.xlane.f32.xlu0 %v261
      %v263 = vpop.xlane.xlu0 %262
      %v264 = vsel %vm206, %v193, 0.0
      %265 = vadd.xlane.f32.xlu0 %v264
      %v266 = vpop.xlane.xlu0 %265
      %v267 = vsel %vm206, %v194, 0.0
      %268 = vadd.xlane.f32.xlu0 %v267
      %v269 = vpop.xlane.xlu0 %268
      %v270 = vsel %vm206, %v195, 0.0
      %271 = vadd.xlane.f32.xlu0 %v270
      %v272 = vpop.xlane.xlu0 %271
      %v273 = vsel %vm206, %v196, 0.0
      %274 = vadd.xlane.f32.xlu0 %v273
      %v275 = vpop.xlane.xlu0 %274
      %v276 = vsel %vm206, %v197, 0.0
      %277 = vadd.xlane.f32.xlu0 %v276
      %v278 = vpop.xlane.xlu0 %277
      %v279 = vsel %vm206, %v198, 0.0
      %280 = vadd.xlane.f32.xlu0 %v279
      %v281 = vpop.xlane.xlu0 %280
      %v282 = vsel %vm206, %v199, 0.0
      %283 = vadd.xlane.f32.xlu0 %v282
      %v284 = vpop.xlane.xlu0 %283
      %v285 = vsel %vm206, %v200, 0.0
      %286 = vadd.xlane.f32.xlu0 %v285
      %v287 = vpop.xlane.xlu0 %286
      %v288 = vsel %vm206, %v201, 0.0
      %289 = vadd.xlane.f32.xlu0 %v288
      %v290 = vpop.xlane.xlu0 %289
      %v291 = vsel %vm206, %v202, 0.0
      %292 = vadd.xlane.f32.xlu0 %v291
      %v293 = vpop.xlane.xlu0 %292
      %v294 = vsel %vm206, %v203, 0.0
      %295 = vadd.xlane.f32.xlu0 %v294
      %v296 = vpop.xlane.xlu0 %295
      %v297 = vsel %vm206, %v204, 0.0
      %298 = vadd.xlane.f32.xlu0 %v297
      %v299 = vpop.xlane.xlu0 %298
      %v300 = vsel %vm206, %v205, 0.0
      %301 = vadd.xlane.f32.xlu0 %v300
      %v302 = vpop.xlane.xlu0 %301
      %v303 = vmul.f32 %v174, %v174
      %v304 = vmul.f32 %v175, %v175
      %v305 = vmul.f32 %v176, %v176
      %v306 = vmul.f32 %v177, %v177
      %v307 = vmul.f32 %v178, %v178
      %v308 = vmul.f32 %v179, %v179
      %v309 = vmul.f32 %v180, %v180
      %v310 = vmul.f32 %v181, %v181
      %v311 = vmul.f32 %v182, %v182
      %v312 = vmul.f32 %v183, %v183
      %v313 = vmul.f32 %v184, %v184
      %v314 = vmul.f32 %v185, %v185
      %v315 = vmul.f32 %v186, %v186
      %v316 = vmul.f32 %v187, %v187
      %v317 = vmul.f32 %v188, %v188
      %v318 = vmul.f32 %v189, %v189
      %v319 = vmul.f32 %v190, %v190
      %v320 = vmul.f32 %v191, %v191
      %v321 = vmul.f32 %v192, %v192
      %v322 = vmul.f32 %v193, %v193
      %v323 = vmul.f32 %v194, %v194
      %v324 = vmul.f32 %v195, %v195
      %v325 = vmul.f32 %v196, %v196
      %v326 = vmul.f32 %v197, %v197
      %v327 = vmul.f32 %v198, %v198
      %v328 = vmul.f32 %v199, %v199
      %v329 = vmul.f32 %v200, %v200
      %v330 = vmul.f32 %v201, %v201
      %v331 = vmul.f32 %v202, %v202
      %v332 = vmul.f32 %v203, %v203
      %v333 = vmul.f32 %v204, %v204
      %v334 = vmul.f32 %v205, %v205
      %v335 = vsel %vm206, %v303, 0.0
      %336 = vadd.xlane.f32.xlu0 %v335
      %v337 = vpop.xlane.xlu0 %336
      %v338 = vsel %vm206, %v304, 0.0
      %339 = vadd.xlane.f32.xlu0 %v338
      %v340 = vpop.xlane.xlu0 %339
      %v341 = vsel %vm206, %v305, 0.0
      %342 = vadd.xlane.f32.xlu0 %v341
      %v343 = vpop.xlane.xlu0 %342
      %v344 = vsel %vm206, %v306, 0.0
      %345 = vadd.xlane.f32.xlu0 %v344
      %v346 = vpop.xlane.xlu0 %345
      %v347 = vsel %vm206, %v307, 0.0
      %348 = vadd.xlane.f32.xlu0 %v347
      %v349 = vpop.xlane.xlu0 %348
      %v350 = vsel %vm206, %v308, 0.0
      %351 = vadd.xlane.f32.xlu0 %v350
      %v352 = vpop.xlane.xlu0 %351
      %v353 = vsel %vm206, %v309, 0.0
      %354 = vadd.xlane.f32.xlu0 %v353
      %v355 = vpop.xlane.xlu0 %354
      %v356 = vsel %vm206, %v310, 0.0
      %357 = vadd.xlane.f32.xlu0 %v356
      %v358 = vpop.xlane.xlu0 %357
      %v359 = vsel %vm206, %v311, 0.0
      %360 = vadd.xlane.f32.xlu0 %v359
      %v361 = vpop.xlane.xlu0 %360
      %v362 = vsel %vm206, %v312, 0.0
      %363 = vadd.xlane.f32.xlu0 %v362
      %v364 = vpop.xlane.xlu0 %363
      %v365 = vsel %vm206, %v313, 0.0
      %366 = vadd.xlane.f32.xlu0 %v365
      %v367 = vpop.xlane.xlu0 %366
      %v368 = vsel %vm206, %v314, 0.0
      %369 = vadd.xlane.f32.xlu0 %v368
      %v370 = vpop.xlane.xlu0 %369
      %v371 = vsel %vm206, %v315, 0.0
      %372 = vadd.xlane.f32.xlu0 %v371
      %v373 = vpop.xlane.xlu0 %372
      %v374 = vsel %vm206, %v316, 0.0
      %375 = vadd.xlane.f32.xlu0 %v374
      %v376 = vpop.xlane.xlu0 %375
      %v377 = vsel %vm206, %v317, 0.0
      %378 = vadd.xlane.f32.xlu0 %v377
      %v379 = vpop.xlane.xlu0 %378
      %v380 = vsel %vm206, %v318, 0.0
      %381 = vadd.xlane.f32.xlu0 %v380
      %v382 = vpop.xlane.xlu0 %381
      %v383 = vsel %vm206, %v319, 0.0
      %384 = vadd.xlane.f32.xlu0 %v383
      %v385 = vpop.xlane.xlu0 %384
      %v386 = vsel %vm206, %v320, 0.0
      %387 = vadd.xlane.f32.xlu0 %v386
      %v388 = vpop.xlane.xlu0 %387
      %v389 = vsel %vm206, %v321, 0.0
      %390 = vadd.xlane.f32.xlu0 %v389
      %v391 = vpop.xlane.xlu0 %390
      %v392 = vsel %vm206, %v322, 0.0
      %393 = vadd.xlane.f32.xlu0 %v392
      %v394 = vpop.xlane.xlu0 %393
      %v395 = vsel %vm206, %v323, 0.0
      %396 = vadd.xlane.f32.xlu0 %v395
      %v397 = vpop.xlane.xlu0 %396
      %v398 = vsel %vm206, %v324, 0.0
      %399 = vadd.xlane.f32.xlu0 %v398
      %v400 = vpop.xlane.xlu0 %399
      %v401 = vsel %vm206, %v325, 0.0
      %402 = vadd.xlane.f32.xlu0 %v401
      %v403 = vpop.xlane.xlu0 %402
      %v404 = vsel %vm206, %v326, 0.0
      %405 = vadd.xlane.f32.xlu0 %v404
      %v406 = vpop.xlane.xlu0 %405
      %v407 = vsel %vm206, %v327, 0.0
      %408 = vadd.xlane.f32.xlu0 %v407
      %v409 = vpop.xlane.xlu0 %408
      %v410 = vsel %vm206, %v328, 0.0
      %411 = vadd.xlane.f32.xlu0 %v410
      %v412 = vpop.xlane.xlu0 %411
      %v413 = vsel %vm206, %v329, 0.0
      %414 = vadd.xlane.f32.xlu0 %v413
      %v415 = vpop.xlane.xlu0 %414
      %v416 = vsel %vm206, %v330, 0.0
      %417 = vadd.xlane.f32.xlu0 %v416
      %v418 = vpop.xlane.xlu0 %417
      %v419 = vsel %vm206, %v331, 0.0
      %420 = vadd.xlane.f32.xlu0 %v419
      %v421 = vpop.xlane.xlu0 %420
      %v422 = vsel %vm206, %v332, 0.0
      %423 = vadd.xlane.f32.xlu0 %v422
      %v424 = vpop.xlane.xlu0 %423
      %v425 = vsel %vm206, %v333, 0.0
      %426 = vadd.xlane.f32.xlu0 %v425
      %v427 = vpop.xlane.xlu0 %426
      %v428 = vsel %vm206, %v334, 0.0
      %429 = vadd.xlane.f32.xlu0 %v428
      %v430 = vpop.xlane.xlu0 %429
      %v431 = vrcp.pop 32.0
      %v432 = vmul.f32 %v209, %v431
      %v433 = vmul.f32 %v212, %v431
      %v434 = vmul.f32 %v215, %v431
      %v435 = vmul.f32 %v218, %v431
      %v436 = vmul.f32 %v221, %v431
      %v437 = vmul.f32 %v224, %v431
      %v438 = vmul.f32 %v227, %v431
      %v439 = vmul.f32 %v230, %v431
      %v440 = vmul.f32 %v233, %v431
      %v441 = vmul.f32 %v236, %v431
      %v442 = vmul.f32 %v239, %v431
      %v443 = vmul.f32 %v242, %v431
      %v444 = vmul.f32 %v245, %v431
      %v445 = vmul.f32 %v248, %v431
      %v446 = vmul.f32 %v251, %v431
      %v447 = vmul.f32 %v254, %v431
      %v448 = vmul.f32 %v257, %v431
      %v449 = vmul.f32 %v260, %v431
      %v450 = vmul.f32 %v263, %v431
      %v451 = vmul.f32 %v266, %v431
      %v452 = vmul.f32 %v269, %v431
      %v453 = vmul.f32 %v272, %v431
      %v454 = vmul.f32 %v275, %v431
      %v455 = vmul.f32 %v278, %v431
      %v456 = vmul.f32 %v281, %v431
      %v457 = vmul.f32 %v284, %v431
      %v458 = vmul.f32 %v287, %v431
      %v459 = vmul.f32 %v290, %v431
      %v460 = vmul.f32 %v293, %v431
      %v461 = vmul.f32 %v296, %v431
      %v462 = vmul.f32 %v299, %v431
      %v463 = vmul.f32 %v302, %v431
      %v464 = vmul.f32 %v337, %v431
      %v465 = vmul.f32 %v340, %v431
      %v466 = vmul.f32 %v343, %v431
      %v467 = vmul.f32 %v346, %v431
      %v468 = vmul.f32 %v349, %v431
      %v469 = vmul.f32 %v352, %v431
      %v470 = vmul.f32 %v355, %v431
      %v471 = vmul.f32 %v358, %v431
      %v472 = vmul.f32 %v361, %v431
      %v473 = vmul.f32 %v364, %v431
      %v474 = vmul.f32 %v367, %v431
      %v475 = vmul.f32 %v370, %v431
      %v476 = vmul.f32 %v373, %v431
      %v477 = vmul.f32 %v376, %v431
      %v478 = vmul.f32 %v379, %v431
      %v479 = vmul.f32 %v382, %v431
      %v480 = vmul.f32 %v385, %v431
      %v481 = vmul.f32 %v388, %v431
      %v482 = vmul.f32 %v391, %v431
      %v483 = vmul.f32 %v394, %v431
      %v484 = vmul.f32 %v397, %v431
      %v485 = vmul.f32 %v400, %v431
      %v486 = vmul.f32 %v403, %v431
      %v487 = vmul.f32 %v406, %v431
      %v488 = vmul.f32 %v409, %v431
      %v489 = vmul.f32 %v412, %v431
      %v490 = vmul.f32 %v415, %v431
      %v491 = vmul.f32 %v418, %v431
      %v492 = vmul.f32 %v421, %v431
      %v493 = vmul.f32 %v424, %v431
      %v494 = vmul.f32 %v427, %v431
      %v495 = vmul.f32 %v430, %v431
      %v496 = vmul.f32 %v432, %v432
      %v497 = vmul.f32 %v433, %v433
      %v498 = vmul.f32 %v434, %v434
      %v499 = vmul.f32 %v435, %v435
      %v500 = vmul.f32 %v436, %v436
      %v501 = vmul.f32 %v437, %v437
      %v502 = vmul.f32 %v438, %v438
      %v503 = vmul.f32 %v439, %v439
      %v504 = vmul.f32 %v440, %v440
      %v505 = vmul.f32 %v441, %v441
      %v506 = vmul.f32 %v442, %v442
      %v507 = vmul.f32 %v443, %v443
      %v508 = vmul.f32 %v444, %v444
      %v509 = vmul.f32 %v445, %v445
      %v510 = vmul.f32 %v446, %v446
      %v511 = vmul.f32 %v447, %v447
      %v512 = vmul.f32 %v448, %v448
      %v513 = vmul.f32 %v449, %v449
      %v514 = vmul.f32 %v450, %v450
      %v515 = vmul.f32 %v451, %v451
      %v516 = vmul.f32 %v452, %v452
      %v517 = vmul.f32 %v453, %v453
      %v518 = vmul.f32 %v454, %v454
      %v519 = vmul.f32 %v455, %v455
      %v520 = vmul.f32 %v456, %v456
      %v521 = vmul.f32 %v457, %v457
      %v522 = vmul.f32 %v458, %v458
      %v523 = vmul.f32 %v459, %v459
      %v524 = vmul.f32 %v460, %v460
      %v525 = vmul.f32 %v461, %v461
      %v526 = vmul.f32 %v462, %v462
      %v527 = vmul.f32 %v463, %v463
      %v528 = vsub.f32 %v464, %v496
      %v529 = vsub.f32 %v465, %v497
      %v530 = vsub.f32 %v466, %v498
      %v531 = vsub.f32 %v467, %v499
      %v532 = vsub.f32 %v468, %v500
      %v533 = vsub.f32 %v469, %v501
      %v534 = vsub.f32 %v470, %v502
      %v535 = vsub.f32 %v471, %v503
      %v536 = vsub.f32 %v472, %v504
      %v537 = vsub.f32 %v473, %v505
      %v538 = vsub.f32 %v474, %v506
      %v539 = vsub.f32 %v475, %v507
      %v540 = vsub.f32 %v476, %v508
      %v541 = vsub.f32 %v477, %v509
      %v542 = vsub.f32 %v478, %v510
      %v543 = vsub.f32 %v479, %v511
      %v544 = vsub.f32 %v480, %v512
      %v545 = vsub.f32 %v481, %v513
      %v546 = vsub.f32 %v482, %v514
      %v547 = vsub.f32 %v483, %v515
      %v548 = vsub.f32 %v484, %v516
      %v549 = vsub.f32 %v485, %v517
      %v550 = vsub.f32 %v486, %v518
      %v551 = vsub.f32 %v487, %v519
      %v552 = vsub.f32 %v488, %v520
      %v553 = vsub.f32 %v489, %v521
      %v554 = vsub.f32 %v490, %v522
      %v555 = vsub.f32 %v491, %v523
      %v556 = vsub.f32 %v492, %v524
      %v557 = vsub.f32 %v493, %v525
      %v558 = vsub.f32 %v494, %v526
      %v559 = vsub.f32 %v495, %v527
      %v560 = vsub.f32 %v174, %v432
      %v561 = vsub.f32 %v175, %v433
      %v562 = vsub.f32 %v176, %v434
      %v563 = vsub.f32 %v177, %v435
      %v564 = vsub.f32 %v178, %v436
      %v565 = vsub.f32 %v179, %v437
      %v566 = vsub.f32 %v180, %v438
      %v567 = vsub.f32 %v181, %v439
      %v568 = vsub.f32 %v182, %v440
      %v569 = vsub.f32 %v183, %v441
      %v570 = vsub.f32 %v184, %v442
      %v571 = vsub.f32 %v185, %v443
      %v572 = vsub.f32 %v186, %v444
      %v573 = vsub.f32 %v187, %v445
      %v574 = vsub.f32 %v188, %v446
      %v575 = vsub.f32 %v189, %v447
      %v576 = vsub.f32 %v190, %v448
      %v577 = vsub.f32 %v191, %v449
      %v578 = vsub.f32 %v192, %v450
      %v579 = vsub.f32 %v193, %v451
      %v580 = vsub.f32 %v194, %v452
      %v581 = vsub.f32 %v195, %v453
      %v582 = vsub.f32 %v196, %v454
      %v583 = vsub.f32 %v197, %v455
      %v584 = vsub.f32 %v198, %v456
      %v585 = vsub.f32 %v199, %v457
      %v586 = vsub.f32 %v200, %v458
      %v587 = vsub.f32 %v201, %v459
      %v588 = vsub.f32 %v202, %v460
      %v589 = vsub.f32 %v203, %v461
      %v590 = vsub.f32 %v204, %v462
      %v591 = vsub.f32 %v205, %v463
      %v592 = vadd.f32 %v528, 1e-05
      %v593 = vadd.f32 %v529, 1e-05
      %v594 = vadd.f32 %v530, 1e-05
      %v595 = vadd.f32 %v531, 1e-05
      %v596 = vadd.f32 %v532, 1e-05
      %v597 = vadd.f32 %v533, 1e-05
      %v598 = vadd.f32 %v534, 1e-05
      %v599 = vadd.f32 %v535, 1e-05
      %v600 = vadd.f32 %v536, 1e-05
      %v601 = vadd.f32 %v537, 1e-05
      %v602 = vadd.f32 %v538, 1e-05
      %v603 = vadd.f32 %v539, 1e-05
      %v604 = vadd.f32 %v540, 1e-05
      %v605 = vadd.f32 %v541, 1e-05
      %v606 = vadd.f32 %v542, 1e-05
      %v607 = vadd.f32 %v543, 1e-05
      %v608 = vadd.f32 %v544, 1e-05
      %v609 = vadd.f32 %v545, 1e-05
      %v610 = vadd.f32 %v546, 1e-05
      %v611 = vadd.f32 %v547, 1e-05
      %v612 = vadd.f32 %v548, 1e-05
      %v613 = vadd.f32 %v549, 1e-05
      %v614 = vadd.f32 %v550, 1e-05
      %v615 = vadd.f32 %v551, 1e-05
      %v616 = vadd.f32 %v552, 1e-05
      %v617 = vadd.f32 %v553, 1e-05
      %v618 = vadd.f32 %v554, 1e-05
      %v619 = vadd.f32 %v555, 1e-05
      %v620 = vadd.f32 %v556, 1e-05
      %v621 = vadd.f32 %v557, 1e-05
      %v622 = vadd.f32 %v558, 1e-05
      %v623 = vadd.f32 %v559, 1e-05
      %v624 = vrsqrt.pop %v592
      %v625 = vrsqrt.pop %v593
      %v626 = vrsqrt.pop %v594
      %v627 = vrsqrt.pop %v595
      %v628 = vrsqrt.pop %v596
      %v629 = vrsqrt.pop %v597
      %v630 = vrsqrt.pop %v598
      %v631 = vrsqrt.pop %v599
      %v632 = vrsqrt.pop %v600
      %v633 = vrsqrt.pop %v601
      %v634 = vrsqrt.pop %v602
      %v635 = vrsqrt.pop %v603
      %v636 = vrsqrt.pop %v604
      %v637 = vrsqrt.pop %v605
      %v638 = vrsqrt.pop %v606
      %v639 = vrsqrt.pop %v607
      %v640 = vrsqrt.pop %v608
      %v641 = vrsqrt.pop %v609
      %v642 = vrsqrt.pop %v610
      %v643 = vrsqrt.pop %v611
      %v644 = vrsqrt.pop %v612
      %v645 = vrsqrt.pop %v613
      %v646 = vrsqrt.pop %v614
      %v647 = vrsqrt.pop %v615
      %v648 = vrsqrt.pop %v616
      %v649 = vrsqrt.pop %v617
      %v650 = vrsqrt.pop %v618
      %v651 = vrsqrt.pop %v619
      %v652 = vrsqrt.pop %v620
      %v653 = vrsqrt.pop %v621
      %v654 = vrsqrt.pop %v622
      %v655 = vrsqrt.pop %v623
      %v656 = vmul.f32 %v560, %v624
      %v657 = vmul.f32 %v561, %v625
      %v658 = vmul.f32 %v562, %v626
      %v659 = vmul.f32 %v563, %v627
      %v660 = vmul.f32 %v564, %v628
      %v661 = vmul.f32 %v565, %v629
      %v662 = vmul.f32 %v566, %v630
      %v663 = vmul.f32 %v567, %v631
      %v664 = vmul.f32 %v568, %v632
      %v665 = vmul.f32 %v569, %v633
      %v666 = vmul.f32 %v570, %v634
      %v667 = vmul.f32 %v571, %v635
      %v668 = vmul.f32 %v572, %v636
      %v669 = vmul.f32 %v573, %v637
      %v670 = vmul.f32 %v574, %v638
      %v671 = vmul.f32 %v575, %v639
      %v672 = vmul.f32 %v576, %v640
      %v673 = vmul.f32 %v577, %v641
      %v674 = vmul.f32 %v578, %v642
      %v675 = vmul.f32 %v579, %v643
      %v676 = vmul.f32 %v580, %v644
      %v677 = vmul.f32 %v581, %v645
      %v678 = vmul.f32 %v582, %v646
      %v679 = vmul.f32 %v583, %v647
      %v680 = vmul.f32 %v584, %v648
      %v681 = vmul.f32 %v585, %v649
      %v682 = vmul.f32 %v586, %v650
      %v683 = vmul.f32 %v587, %v651
      %v684 = vmul.f32 %v588, %v652
      %v685 = vmul.f32 %v589, %v653
      %v686 = vmul.f32 %v590, %v654
      %v687 = vmul.f32 %v591, %v655
      %v688 = vld [vmem:[%s1] sm:$0xff]
      %v689 = vld [vmem:[%s1 + $0x8] sm:$0xff]
      %v690 = vld [vmem:[%s1 + $0x10] sm:$0xff]
      %v691 = vld [vmem:[%s1 + $0x18] sm:$0xff]
      %v692 = vld [vmem:[%s2] sm:$0x1]
      %v694 = vlaneseq
      %v695 = vshrl.u32 %v694, 7
      %v696 = vsub.s32 0, %v695
      %v697 = vrot.slane %v692, %v696
      %v700 = vsel %vm206, %v656, 0
      %v703 = vsel %vm206, %v657, 0
      %v706 = vsel %vm206, %v658, 0
      %v709 = vsel %vm206, %v659, 0
      %v712 = vsel %vm206, %v660, 0
      %v715 = vsel %vm206, %v661, 0
      %v718 = vsel %vm206, %v662, 0
      %v721 = vsel %vm206, %v663, 0
      %v724 = vsel %vm206, %v664, 0
      %v727 = vsel %vm206, %v665, 0
      %v730 = vsel %vm206, %v666, 0
      %v733 = vsel %vm206, %v667, 0
      %v736 = vsel %vm206, %v668, 0
      %v739 = vsel %vm206, %v669, 0
      %v742 = vsel %vm206, %v670, 0
      %v745 = vsel %vm206, %v671, 0
      %v748 = vsel %vm206, %v672, 0
      %v751 = vsel %vm206, %v673, 0
      %v754 = vsel %vm206, %v674, 0
      %v757 = vsel %vm206, %v675, 0
      %v760 = vsel %vm206, %v676, 0
      %v763 = vsel %vm206, %v677, 0
      %v766 = vsel %vm206, %v678, 0
      %v769 = vsel %vm206, %v679, 0
      %v772 = vsel %vm206, %v680, 0
      %v775 = vsel %vm206, %v681, 0
      %v778 = vsel %vm206, %v682, 0
      %v781 = vsel %vm206, %v683, 0
      %v784 = vsel %vm206, %v684, 0
      %v787 = vsel %vm206, %v685, 0
      %v790 = vsel %vm206, %v686, 0
      %v793 = vsel %vm206, %v687, 0
      %795 = vmatprep.subr.mxu0 0.0
      %v796 = vand.u32 %v688, 4294901760
      %797 = vmatpush1.msra.mxu0 %v796
      %798 = vmatprep.subr.mxu0 0.0
      %v799 = vand.u32 %v689, 4294901760
      %800 = vmatpush1.msra.mxu0 %v799
      %801 = vmatprep.subr.mxu0 0.0
      %v802 = vand.u32 %v690, 4294901760
      %803 = vmatpush1.msra.mxu0 %v802
      %804 = vmatprep.subr.mxu0 0.0
      %v805 = vand.u32 %v691, 4294901760
      %806 = vmatpush1.msra.mxu0 %v805
      %807 = vmatprep.subr.mxu0 0.0
      %808 = vmatpush1.msra.mxu0 0.0
      %809 = vmatprep.subr.mxu0 0.0
      %810 = vmatpush1.msra.mxu0 0.0
      %811 = vmatprep.subr.mxu0 0.0
      %812 = vmatpush1.msra.mxu0 0.0
      %813 = vmatprep.subr.mxu0 0.0
      %814 = vmatpush1.msra.mxu0 0.0
      %815 = vmatprep.subr.mxu0 0.0
      %816 = vmatpush1.msra.mxu0 0.0
      %817 = vmatprep.subr.mxu0 0.0
      %818 = vmatpush1.msra.mxu0 0.0
      %819 = vmatprep.subr.mxu0 0.0
      %820 = vmatpush1.msra.mxu0 0.0
      %821 = vmatprep.subr.mxu0 0.0
      %822 = vmatpush1.msra.mxu0 0.0
      %823 = vmatprep.subr.mxu0 0.0
      %824 = vmatpush1.msra.mxu0 0.0
      %825 = vmatprep.subr.mxu0 0.0
      %826 = vmatpush1.msra.mxu0 0.0
      %827 = vmatprep.subr.mxu0 0.0
      %828 = vmatpush1.msra.mxu0 0.0
      %829 = vmatprep.subr.mxu0 0.0
      %830 = vmatpush1.msra.mxu0 0.0
      %831 = vmatprep.subr.mxu0 0.0
      %832 = vmatpush1.msra.mxu0 0.0
      %833 = vmatprep.subr.mxu0 0.0
      %834 = vmatpush1.msra.mxu0 0.0
      %835 = vmatprep.subr.mxu0 0.0
      %836 = vmatpush1.msra.mxu0 0.0
      %837 = vmatprep.subr.mxu0 0.0
      %838 = vmatpush1.msra.mxu0 0.0
      %839 = vmatprep.subr.mxu0 0.0
      %840 = vmatpush1.msra.mxu0 0.0
      %841 = vmatprep.subr.mxu0 0.0
      %842 = vmatpush1.msra.mxu0 0.0
      %843 = vmatprep.subr.mxu0 0.0
      %844 = vmatpush1.msra.mxu0 0.0
      %845 = vmatprep.subr.mxu0 0.0
      %846 = vmatpush1.msra.mxu0 0.0
      %847 = vmatprep.subr.mxu0 0.0
      %848 = vmatpush1.msra.mxu0 0.0
      %849 = vmatprep.subr.mxu0 0.0
      %850 = vmatpush1.msra.mxu0 0.0
      %851 = vmatprep.subr.mxu0 0.0
      %852 = vmatpush1.msra.mxu0 0.0
      %853 = vmatprep.subr.mxu0 0.0
      %854 = vmatpush1.msra.mxu0 0.0
      %855 = vmatprep.subr.mxu0 0.0
      %856 = vmatpush1.msra.mxu0 0.0
      %857 = vmatprep.subr.mxu0 0.0
      %858 = vmatpush1.msra.mxu0 0.0
      %859 = vmatprep.subr.mxu0 0.0
      %860 = vmatpush1.msra.mxu0 0.0
      %861 = vmatprep.subr.mxu0 0.0
      %862 = vmatpush1.msra.mxu0 0.0
      %863 = vmatprep.mubr.f32.mxu0 0.0
      %v864 = vand.u32 %v700, 4294901760
      %v865 = vsub.f32 %v700, %v864
      %v866 = vand.u32 %v865, 4294901760
      %v867 = vsub.f32 %v865, %v866
      %v868 = vand.u32 %v867, 4294901760
      %869 = vmatmul.mubr.f32.gmra.mrb[0].mxu0 %v868
      %v870 = vpop.f32.mrb[0].mxu0
      %v871 = vadd.f32 %v697, %v870
      %v872 = vpop.f32.mrb[0].mxu0
      %873 = vmatprep.mubr.f32.mxu0 0.0
      %v874 = vand.u32 %v703, 4294901760
      %v875 = vsub.f32 %v703, %v874
      %v876 = vand.u32 %v875, 4294901760
      %v877 = vsub.f32 %v875, %v876
      %v878 = vand.u32 %v877, 4294901760
      %879 = vmatmul.mubr.f32.gmra.mrb[0].mxu0 %v878
      %v880 = vpop.f32.mrb[0].mxu0
      %v881 = vadd.f32 %v697, %v880
      %v882 = vpop.f32.mrb[0].mxu0
      %883 = vmatprep.mubr.f32.mxu0 0.0
      %v884 = vand.u32 %v706, 4294901760
      %v885 = vsub.f32 %v706, %v884
      %v886 = vand.u32 %v885, 4294901760
      %v887 = vsub.f32 %v885, %v886
      %v888 = vand.u32 %v887, 4294901760
      %889 = vmatmul.mubr.f32.gmra.mrb[0].mxu0 %v888
      %v890 = vpop.f32.mrb[0].mxu0
      %v891 = vadd.f32 %v697, %v890
      %v892 = vpop.f32.mrb[0].mxu0
      %893 = vmatprep.mubr.f32.mxu0 0.0
      %v894 = vand.u32 %v709, 4294901760
      %v895 = vsub.f32 %v709, %v894
      %v896 = vand.u32 %v895, 4294901760
      %v897 = vsub.f32 %v895, %v896
      %v898 = vand.u32 %v897, 4294901760
      %899 = vmatmul.mubr.f32.gmra.mrb[0].mxu0 %v898
      %v900 = vpop.f32.mrb[0].mxu0
      %v901 = vadd.f32 %v697, %v900
      %v902 = vpop.f32.mrb[0].mxu0
      %903 = vmatprep.mubr.f32.mxu0 0.0
      %v904 = vand.u32 %v712, 4294901760
      %v905 = vsub.f32 %v712, %v904
      %v906 = vand.u32 %v905, 4294901760
      %v907 = vsub.f32 %v905, %v906
      %v908 = vand.u32 %v907, 4294901760
      %909 = vmatmul.mubr.f32.gmra.mrb[0].mxu0 %v908
      %v910 = vpop.f32.mrb[0].mxu0
      %v911 = vadd.f32 %v697, %v910
      %v912 = vpop.f32.mrb[0].mxu0
      %913 = vmatprep.mubr.f32.mxu0 0.0
      %v914 = vand.u32 %v715, 4294901760
      %v915 = vsub.f32 %v715, %v914
      %v916 = vand.u32 %v915, 4294901760
      %v917 = vsub.f32 %v915, %v916
      %v918 = vand.u32 %v917, 4294901760
      %919 = vmatmul.mubr.f32.gmra.mrb[0].mxu0 %v918
      %v920 = vpop.f32.mrb[0].mxu0
      %v921 = vadd.f32 %v697, %v920
      %v922 = vpop.f32.mrb[0].mxu0
      %923 = vmatprep.mubr.f32.mxu0 0.0
      %v924 = vand.u32 %v718, 4294901760
      %v925 = vsub.f32 %v718, %v924
      %v926 = vand.u32 %v925, 4294901760
      %v927 = vsub.f32 %v925, %v926
      %v928 = vand.u32 %v927, 4294901760
      %929 = vmatmul.mubr.f32.gmra.mrb[0].mxu0 %v928
      %v930 = vpop.f32.mrb[0].mxu0
      %v931 = vadd.f32 %v697, %v930
      %v932 = vpop.f32.mrb[0].mxu0
      %933 = vmatprep.mubr.f32.mxu0 0.0
      %v934 = vand.u32 %v721, 4294901760
      %v935 = vsub.f32 %v721, %v934
      %v936 = vand.u32 %v935, 4294901760
      %v937 = vsub.f32 %v935, %v936
      %v938 = vand.u32 %v937, 4294901760
      %939 = vmatmul.mubr.f32.gmra.mrb[0].mxu0 %v938
      %v940 = vpop.f32.mrb[0].mxu0
      %v941 = vadd.f32 %v697, %v940
      %v942 = vpop.f32.mrb[0].mxu0
      %943 = vmatprep.mubr.f32.mxu0 0.0
      %v944 = vand.u32 %v724, 4294901760
      %v945 = vsub.f32 %v724, %v944
      %v946 = vand.u32 %v945, 4294901760
      %v947 = vsub.f32 %v945, %v946
      %v948 = vand.u32 %v947, 4294901760
      %949 = vmatmul.mubr.f32.gmra.mrb[0].mxu0 %v948
      %v950 = vpop.f32.mrb[0].mxu0
      %v951 = vadd.f32 %v697, %v950
      %v952 = vpop.f32.mrb[0].mxu0
      %953 = vmatprep.mubr.f32.mxu0 0.0
      %v954 = vand.u32 %v727, 4294901760
      %v955 = vsub.f32 %v727, %v954
      %v956 = vand.u32 %v955, 4294901760
      %v957 = vsub.f32 %v955, %v956
      %v958 = vand.u32 %v957, 4294901760
      %959 = vmatmul.mubr.f32.gmra.mrb[0].mxu0 %v958
      %v960 = vpop.f32.mrb[0].mxu0
      %v961 = vadd.f32 %v697, %v960
      %v962 = vpop.f32.mrb[0].mxu0
      %963 = vmatprep.mubr.f32.mxu0 0.0
      %v964 = vand.u32 %v730, 4294901760
      %v965 = vsub.f32 %v730, %v964
      %v966 = vand.u32 %v965, 4294901760
      %v967 = vsub.f32 %v965, %v966
      %v968 = vand.u32 %v967, 4294901760
      %969 = vmatmul.mubr.f32.gmra.mrb[0].mxu0 %v968
      %v970 = vpop.f32.mrb[0].mxu0
      %v971 = vadd.f32 %v697, %v970
      %v972 = vpop.f32.mrb[0].mxu0
      %973 = vmatprep.mubr.f32.mxu0 0.0
      %v974 = vand.u32 %v733, 4294901760
      %v975 = vsub.f32 %v733, %v974
      %v976 = vand.u32 %v975, 4294901760
      %v977 = vsub.f32 %v975, %v976
      %v978 = vand.u32 %v977, 4294901760
      %979 = vmatmul.mubr.f32.gmra.mrb[0].mxu0 %v978
      %v980 = vpop.f32.mrb[0].mxu0
      %v981 = vadd.f32 %v697, %v980
      %v982 = vpop.f32.mrb[0].mxu0
      %983 = vmatprep.mubr.f32.mxu0 0.0
      %v984 = vand.u32 %v736, 4294901760
      %v985 = vsub.f32 %v736, %v984
      %v986 = vand.u32 %v985, 4294901760
      %v987 = vsub.f32 %v985, %v986
      %v988 = vand.u32 %v987, 4294901760
      %989 = vmatmul.mubr.f32.gmra.mrb[0].mxu0 %v988
      %v990 = vpop.f32.mrb[0].mxu0
      %v991 = vadd.f32 %v697, %v990
      %v992 = vpop.f32.mrb[0].mxu0
      %993 = vmatprep.mubr.f32.mxu0 0.0
      %v994 = vand.u32 %v739, 4294901760
      %v995 = vsub.f32 %v739, %v994
      %v996 = vand.u32 %v995, 4294901760
      %v997 = vsub.f32 %v995, %v996
      %v998 = vand.u32 %v997, 4294901760
      %999 = vmatmul.mubr.f32.gmra.mrb[0].mxu0 %v998
      %v1000 = vpop.f32.mrb[0].mxu0
      %v1001 = vadd.f32 %v697, %v1000
      %v1002 = vpop.f32.mrb[0].mxu0
      %1003 = vmatprep.mubr.f32.mxu0 0.0
      %v1004 = vand.u32 %v742, 4294901760
      %v1005 = vsub.f32 %v742, %v1004
      %v1006 = vand.u32 %v1005, 4294901760
      %v1007 = vsub.f32 %v1005, %v1006
      %v1008 = vand.u32 %v1007, 4294901760
      %1009 = vmatmul.mubr.f32.gmra.mrb[0].mxu0 %v1008
      %v1010 = vpop.f32.mrb[0].mxu0
      %v1011 = vadd.f32 %v697, %v1010
      %v1012 = vpop.f32.mrb[0].mxu0
      %1013 = vmatprep.mubr.f32.mxu0 0.0
      %v1014 = vand.u32 %v745, 4294901760
      %v1015 = vsub.f32 %v745, %v1014
      %v1016 = vand.u32 %v1015, 4294901760
      %v1017 = vsub.f32 %v1015, %v1016
      %v1018 = vand.u32 %v1017, 4294901760
      %1019 = vmatmul.mubr.f32.gmra.mrb[0].mxu0 %v1018
      %v1020 = vpop.f32.mrb[0].mxu0
      %v1021 = vadd.f32 %v697, %v1020
      %v1022 = vpop.f32.mrb[0].mxu0
      %1023 = vmatprep.mubr.f32.mxu0 0.0
      %v1024 = vand.u32 %v748, 4294901760
      %v1025 = vsub.f32 %v748, %v1024
      %v1026 = vand.u32 %v1025, 4294901760
      %v1027 = vsub.f32 %v1025, %v1026
      %v1028 = vand.u32 %v1027, 4294901760
      %1029 = vmatmul.mubr.f32.gmra.mrb[0].mxu0 %v1028
      %v1030 = vpop.f32.mrb[0].mxu0
      %v1031 = vadd.f32 %v697, %v1030
      %v1032 = vpop.f32.mrb[0].mxu0
      %1033 = vmatprep.mubr.f32.mxu0 0.0
      %v1034 = vand.u32 %v751, 4294901760
      %v1035 = vsub.f32 %v751, %v1034
      %v1036 = vand.u32 %v1035, 4294901760
      %v1037 = vsub.f32 %v1035, %v1036
      %v1038 = vand.u32 %v1037, 4294901760
      %1039 = vmatmul.mubr.f32.gmra.mrb[0].mxu0 %v1038
      %v1040 = vpop.f32.mrb[0].mxu0
      %v1041 = vadd.f32 %v697, %v1040
      %v1042 = vpop.f32.mrb[0].mxu0
      %1043 = vmatprep.mubr.f32.mxu0 0.0
      %v1044 = vand.u32 %v754, 4294901760
      %v1045 = vsub.f32 %v754, %v1044
      %v1046 = vand.u32 %v1045, 4294901760
      %v1047 = vsub.f32 %v1045, %v1046
      %v1048 = vand.u32 %v1047, 4294901760
      %1049 = vmatmul.mubr.f32.gmra.mrb[0].mxu0 %v1048
      %v1050 = vpop.f32.mrb[0].mxu0
      %v1051 = vadd.f32 %v697, %v1050
      %v1052 = vpop.f32.mrb[0].mxu0
      %1053 = vmatprep.mubr.f32.mxu0 0.0
      %v1054 = vand.u32 %v757, 4294901760
      %v1055 = vsub.f32 %v757, %v1054
      %v1056 = vand.u32 %v1055, 4294901760
      %v1057 = vsub.f32 %v1055, %v1056
      %v1058 = vand.u32 %v1057, 4294901760
      %1059 = vmatmul.mubr.f32.gmra.mrb[0].mxu0 %v1058
      %v1060 = vpop.f32.mrb[0].mxu0
      %v1061 = vadd.f32 %v697, %v1060
      %v1062 = vpop.f32.mrb[0].mxu0
      %1063 = vmatprep.mubr.f32.mxu0 0.0
      %v1064 = vand.u32 %v760, 4294901760
      %v1065 = vsub.f32 %v760, %v1064
      %v1066 = vand.u32 %v1065, 4294901760
      %v1067 = vsub.f32 %v1065, %v1066
      %v1068 = vand.u32 %v1067, 4294901760
      %1069 = vmatmul.mubr.f32.gmra.mrb[0].mxu0 %v1068
      %v1070 = vpop.f32.mrb[0].mxu0
      %v1071 = vadd.f32 %v697, %v1070
      %v1072 = vpop.f32.mrb[0].mxu0
      %1073 = vmatprep.mubr.f32.mxu0 0.0
      %v1074 = vand.u32 %v763, 4294901760
      %v1075 = vsub.f32 %v763, %v1074
      %v1076 = vand.u32 %v1075, 4294901760
      %v1077 = vsub.f32 %v1075, %v1076
      %v1078 = vand.u32 %v1077, 4294901760
      %1079 = vmatmul.mubr.f32.gmra.mrb[0].mxu0 %v1078
      %v1080 = vpop.f32.mrb[0].mxu0
      %v1081 = vadd.f32 %v697, %v1080
      %v1082 = vpop.f32.mrb[0].mxu0
      %1083 = vmatprep.mubr.f32.mxu0 0.0
      %v1084 = vand.u32 %v766, 4294901760
      %v1085 = vsub.f32 %v766, %v1084
      %v1086 = vand.u32 %v1085, 4294901760
      %v1087 = vsub.f32 %v1085, %v1086
      %v1088 = vand.u32 %v1087, 4294901760
      %1089 = vmatmul.mubr.f32.gmra.mrb[0].mxu0 %v1088
      %v1090 = vpop.f32.mrb[0].mxu0
      %v1091 = vadd.f32 %v697, %v1090
      %v1092 = vpop.f32.mrb[0].mxu0
      %1093 = vmatprep.mubr.f32.mxu0 0.0
      %v1094 = vand.u32 %v769, 4294901760
      %v1095 = vsub.f32 %v769, %v1094
      %v1096 = vand.u32 %v1095, 4294901760
      %v1097 = vsub.f32 %v1095, %v1096
      %v1098 = vand.u32 %v1097, 4294901760
      %1099 = vmatmul.mubr.f32.gmra.mrb[0].mxu0 %v1098
      %v1100 = vpop.f32.mrb[0].mxu0
      %v1101 = vadd.f32 %v697, %v1100
      %v1102 = vpop.f32.mrb[0].mxu0
      %1103 = vmatprep.mubr.f32.mxu0 0.0
      %v1104 = vand.u32 %v772, 4294901760
      %v1105 = vsub.f32 %v772, %v1104
      %v1106 = vand.u32 %v1105, 4294901760
      %v1107 = vsub.f32 %v1105, %v1106
      %v1108 = vand.u32 %v1107, 4294901760
      %1109 = vmatmul.mubr.f32.gmra.mrb[0].mxu0 %v1108
      %v1110 = vpop.f32.mrb[0].mxu0
      %v1111 = vadd.f32 %v697, %v1110
      %v1112 = vpop.f32.mrb[0].mxu0
      %1113 = vmatprep.mubr.f32.mxu0 0.0
      %v1114 = vand.u32 %v775, 4294901760
      %v1115 = vsub.f32 %v775, %v1114
      %v1116 = vand.u32 %v1115, 4294901760
      %v1117 = vsub.f32 %v1115, %v1116
      %v1118 = vand.u32 %v1117, 4294901760
      %1119 = vmatmul.mubr.f32.gmra.mrb[0].mxu0 %v1118
      %v1120 = vpop.f32.mrb[0].mxu0
      %v1121 = vadd.f32 %v697, %v1120
      %v1122 = vpop.f32.mrb[0].mxu0
      %1123 = vmatprep.mubr.f32.mxu0 0.0
      %v1124 = vand.u32 %v778, 4294901760
      %v1125 = vsub.f32 %v778, %v1124
      %v1126 = vand.u32 %v1125, 4294901760
      %v1127 = vsub.f32 %v1125, %v1126
      %v1128 = vand.u32 %v1127, 4294901760
      %1129 = vmatmul.mubr.f32.gmra.mrb[0].mxu0 %v1128
      %v1130 = vpop.f32.mrb[0].mxu0
      %v1131 = vadd.f32 %v697, %v1130
      %v1132 = vpop.f32.mrb[0].mxu0
      %1133 = vmatprep.mubr.f32.mxu0 0.0
      %v1134 = vand.u32 %v781, 4294901760
      %v1135 = vsub.f32 %v781, %v1134
      %v1136 = vand.u32 %v1135, 4294901760
      %v1137 = vsub.f32 %v1135, %v1136
      %v1138 = vand.u32 %v1137, 4294901760
      %1139 = vmatmul.mubr.f32.gmra.mrb[0].mxu0 %v1138
      %v1140 = vpop.f32.mrb[0].mxu0
      %v1141 = vadd.f32 %v697, %v1140
      %v1142 = vpop.f32.mrb[0].mxu0
      %1143 = vmatprep.mubr.f32.mxu0 0.0
      %v1144 = vand.u32 %v784, 4294901760
      %v1145 = vsub.f32 %v784, %v1144
      %v1146 = vand.u32 %v1145, 4294901760
      %v1147 = vsub.f32 %v1145, %v1146
      %v1148 = vand.u32 %v1147, 4294901760
      %1149 = vmatmul.mubr.f32.gmra.mrb[0].mxu0 %v1148
      %v1150 = vpop.f32.mrb[0].mxu0
      %v1151 = vadd.f32 %v697, %v1150
      %v1152 = vpop.f32.mrb[0].mxu0
      %1153 = vmatprep.mubr.f32.mxu0 0.0
      %v1154 = vand.u32 %v787, 4294901760
      %v1155 = vsub.f32 %v787, %v1154
      %v1156 = vand.u32 %v1155, 4294901760
      %v1157 = vsub.f32 %v1155, %v1156
      %v1158 = vand.u32 %v1157, 4294901760
      %1159 = vmatmul.mubr.f32.gmra.mrb[0].mxu0 %v1158
      %v1160 = vpop.f32.mrb[0].mxu0
      %v1161 = vadd.f32 %v697, %v1160
      %v1162 = vpop.f32.mrb[0].mxu0
      %1163 = vmatprep.mubr.f32.mxu0 0.0
      %v1164 = vand.u32 %v790, 4294901760
      %v1165 = vsub.f32 %v790, %v1164
      %v1166 = vand.u32 %v1165, 4294901760
      %v1167 = vsub.f32 %v1165, %v1166
      %v1168 = vand.u32 %v1167, 4294901760
      %1169 = vmatmul.mubr.f32.gmra.mrb[0].mxu0 %v1168
      %v1170 = vpop.f32.mrb[0].mxu0
      %v1171 = vadd.f32 %v697, %v1170
      %v1172 = vpop.f32.mrb[0].mxu0
      %1173 = vmatprep.mubr.f32.mxu0 0.0
      %v1174 = vand.u32 %v793, 4294901760
      %v1175 = vsub.f32 %v793, %v1174
      %v1176 = vand.u32 %v1175, 4294901760
      %v1177 = vsub.f32 %v1175, %v1176
      %v1178 = vand.u32 %v1177, 4294901760
      %1179 = vmatmul.mubr.f32.gmra.mrb[0].mxu0 %v1178
      %v1180 = vpop.f32.mrb[0].mxu0
      %v1181 = vadd.f32 %v697, %v1180
      %v1182 = vpop.f32.mrb[0].mxu0
      %1183 = vdwg.mxu0
      %1184 = vmatprep.subr.mxu0 0.0
      %v1185 = vand.u32 %v688, 4294901760
      %v1186 = vsub.f32 %v688, %v1185
      %v1187 = vand.u32 %v1186, 4294901760
      %v1188 = vsub.f32 %v1186, %v1187
      %v1189 = vand.u32 %v1188, 4294901760
      %1190 = vmatpush1.msra.mxu0 %v1189
      %1191 = vmatprep.subr.mxu0 0.0
      %v1192 = vand.u32 %v689, 4294901760
      %v1193 = vsub.f32 %v689, %v1192
      %v1194 = vand.u32 %v1193, 4294901760
      %v1195 = vsub.f32 %v1193, %v1194
      %v1196 = vand.u32 %v1195, 4294901760
      %1197 = vmatpush1.msra.mxu0 %v1196
      %1198 = vmatprep.subr.mxu0 0.0
      %v1199 = vand.u32 %v690, 4294901760
      %v1200 = vsub.f32 %v690, %v1199
      %v1201 = vand.u32 %v1200, 4294901760
      %v1202 = vsub.f32 %v1200, %v1201
      %v1203 = vand.u32 %v1202, 4294901760
      %1204 = vmatpush1.msra.mxu0 %v1203
      %1205 = vmatprep.subr.mxu0 0.0
      %v1206 = vand.u32 %v691, 4294901760
      %v1207 = vsub.f32 %v691, %v1206
      %v1208 = vand.u32 %v1207, 4294901760
      %v1209 = vsub.f32 %v1207, %v1208
      %v1210 = vand.u32 %v1209, 4294901760
      %1211 = vmatpush1.msra.mxu0 %v1210
      %1212 = vmatprep.subr.mxu0 0.0
      %1213 = vmatpush1.msra.mxu0 0.0
      %1214 = vmatprep.subr.mxu0 0.0
      %1215 = vmatpush1.msra.mxu0 0.0
      %1216 = vmatprep.subr.mxu0 0.0
      %1217 = vmatpush1.msra.mxu0 0.0
      %1218 = vmatprep.subr.mxu0 0.0
      %1219 = vmatpush1.msra.mxu0 0.0
      %1220 = vmatprep.subr.mxu0 0.0
      %1221 = vmatpush1.msra.mxu0 0.0
      %1222 = vmatprep.subr.mxu0 0.0
      %1223 = vmatpush1.msra.mxu0 0.0
      %1224 = vmatprep.subr.mxu0 0.0
      %1225 = vmatpush1.msra.mxu0 0.0
      %1226 = vmatprep.subr.mxu0 0.0
      %1227 = vmatpush1.msra.mxu0 0.0
      %1228 = vmatprep.subr.mxu0 0.0
      %1229 = vmatpush1.msra.mxu0 0.0
      %1230 = vmatprep.subr.mxu0 0.0
      %1231 = vmatpush1.msra.mxu0 0.0
      %1232 = vmatprep.subr.mxu0 0.0
      %1233 = vmatpush1.msra.mxu0 0.0
      %1234 = vmatprep.subr.mxu0 0.0
      %1235 = vmatpush1.msra.mxu0 0.0
      %1236 = vmatprep.subr.mxu0 0.0
      %1237 = vmatpush1.msra.mxu0 0.0
      %1238 = vmatprep.subr.mxu0 0.0
      %1239 = vmatpush1.msra.mxu0 0.0
      %1240 = vmatprep.subr.mxu0 0.0
      %1241 = vmatpush1.msra.mxu0 0.0
      %1242 = vmatprep.subr.mxu0 0.0
      %1243 = vmatpush1.msra.mxu0 0.0
      %1244 = vmatprep.subr.mxu0 0.0
      %1245 = vmatpush1.msra.mxu0 0.0
      %1246 = vmatprep.subr.mxu0 0.0
      %1247 = vmatpush1.msra.mxu0 0.0
      %1248 = vmatprep.subr.mxu0 0.0
      %1249 = vmatpush1.msra.mxu0 0.0
      %1250 = vmatprep.subr.mxu0 0.0
      %1251 = vmatpush1.msra.mxu0 0.0
      %1252 = vmatprep.subr.mxu0 0.0
      %1253 = vmatpush1.msra.mxu0 0.0
      %1254 = vmatprep.subr.mxu0 0.0
      %1255 = vmatpush1.msra.mxu0 0.0
      %1256 = vmatprep.subr.mxu0 0.0
      %1257 = vmatpush1.msra.mxu0 0.0
      %1258 = vmatprep.subr.mxu0 0.0
      %1259 = vmatpush1.msra.mxu0 0.0
      %1260 = vmatprep.subr.mxu0 0.0
      %1261 = vmatpush1.msra.mxu0 0.0
      %1262 = vmatprep.subr.mxu0 0.0
      %1263 = vmatpush1.msra.mxu0 0.0
      %1264 = vmatprep.subr.mxu0 0.0
      %1265 = vmatpush1.msra.mxu0 0.0
      %1266 = vmatprep.subr.mxu0 0.0
      %1267 = vmatpush1.msra.mxu0 0.0
      %1268 = vmatprep.mubr.f32.mxu0 0.0
      %v1269 = vand.u32 %v700, 4294901760
      %1270 = vmatmul.mubr.f32.gmra.mrb[0].mxu0 %v1269
      %v1271 = vpop.f32.mrb[0].mxu0
      %v1272 = vadd.f32 %v871, %v1271
      %v1273 = vpop.f32.mrb[0].mxu0
      %1274 = vmatprep.mubr.f32.mxu0 0.0
      %v1275 = vand.u32 %v703, 4294901760
      %1276 = vmatmul.mubr.f32.gmra.mrb[0].mxu0 %v1275
      %v1277 = vpop.f32.mrb[0].mxu0
      %v1278 = vadd.f32 %v881, %v1277
      %v1279 = vpop.f32.mrb[0].mxu0
      %1280 = vmatprep.mubr.f32.mxu0 0.0
      %v1281 = vand.u32 %v706, 4294901760
      %1282 = vmatmul.mubr.f32.gmra.mrb[0].mxu0 %v1281
      %v1283 = vpop.f32.mrb[0].mxu0
      %v1284 = vadd.f32 %v891, %v1283
      %v1285 = vpop.f32.mrb[0].mxu0
      %1286 = vmatprep.mubr.f32.mxu0 0.0
      %v1287 = vand.u32 %v709, 4294901760
      %1288 = vmatmul.mubr.f32.gmra.mrb[0].mxu0 %v1287
      %v1289 = vpop.f32.mrb[0].mxu0
      %v1290 = vadd.f32 %v901, %v1289
      %v1291 = vpop.f32.mrb[0].mxu0
      %1292 = vmatprep.mubr.f32.mxu0 0.0
      %v1293 = vand.u32 %v712, 4294901760
      %1294 = vmatmul.mubr.f32.gmra.mrb[0].mxu0 %v1293
      %v1295 = vpop.f32.mrb[0].mxu0
      %v1296 = vadd.f32 %v911, %v1295
      %v1297 = vpop.f32.mrb[0].mxu0
      %1298 = vmatprep.mubr.f32.mxu0 0.0
      %v1299 = vand.u32 %v715, 4294901760
      %1300 = vmatmul.mubr.f32.gmra.mrb[0].mxu0 %v1299
      %v1301 = vpop.f32.mrb[0].mxu0
      %v1302 = vadd.f32 %v921, %v1301
      %v1303 = vpop.f32.mrb[0].mxu0
      %1304 = vmatprep.mubr.f32.mxu0 0.0
      %v1305 = vand.u32 %v718, 4294901760
      %1306 = vmatmul.mubr.f32.gmra.mrb[0].mxu0 %v1305
      %v1307 = vpop.f32.mrb[0].mxu0
      %v1308 = vadd.f32 %v931, %v1307
      %v1309 = vpop.f32.mrb[0].mxu0
      %1310 = vmatprep.mubr.f32.mxu0 0.0
      %v1311 = vand.u32 %v721, 4294901760
      %1312 = vmatmul.mubr.f32.gmra.mrb[0].mxu0 %v1311
      %v1313 = vpop.f32.mrb[0].mxu0
      %v1314 = vadd.f32 %v941, %v1313
      %v1315 = vpop.f32.mrb[0].mxu0
      %1316 = vmatprep.mubr.f32.mxu0 0.0
      %v1317 = vand.u32 %v724, 4294901760
      %1318 = vmatmul.mubr.f32.gmra.mrb[0].mxu0 %v1317
      %v1319 = vpop.f32.mrb[0].mxu0
      %v1320 = vadd.f32 %v951, %v1319
      %v1321 = vpop.f32.mrb[0].mxu0
      %1322 = vmatprep.mubr.f32.mxu0 0.0
      %v1323 = vand.u32 %v727, 4294901760
      %1324 = vmatmul.mubr.f32.gmra.mrb[0].mxu0 %v1323
      %v1325 = vpop.f32.mrb[0].mxu0
      %v1326 = vadd.f32 %v961, %v1325
      %v1327 = vpop.f32.mrb[0].mxu0
      %1328 = vmatprep.mubr.f32.mxu0 0.0
      %v1329 = vand.u32 %v730, 4294901760
      %1330 = vmatmul.mubr.f32.gmra.mrb[0].mxu0 %v1329
      %v1331 = vpop.f32.mrb[0].mxu0
      %v1332 = vadd.f32 %v971, %v1331
      %v1333 = vpop.f32.mrb[0].mxu0
      %1334 = vmatprep.mubr.f32.mxu0 0.0
      %v1335 = vand.u32 %v733, 4294901760
      %1336 = vmatmul.mubr.f32.gmra.mrb[0].mxu0 %v1335
      %v1337 = vpop.f32.mrb[0].mxu0
      %v1338 = vadd.f32 %v981, %v1337
      %v1339 = vpop.f32.mrb[0].mxu0
      %1340 = vmatprep.mubr.f32.mxu0 0.0
      %v1341 = vand.u32 %v736, 4294901760
      %1342 = vmatmul.mubr.f32.gmra.mrb[0].mxu0 %v1341
      %v1343 = vpop.f32.mrb[0].mxu0
      %v1344 = vadd.f32 %v991, %v1343
      %v1345 = vpop.f32.mrb[0].mxu0
      %1346 = vmatprep.mubr.f32.mxu0 0.0
      %v1347 = vand.u32 %v739, 4294901760
      %1348 = vmatmul.mubr.f32.gmra.mrb[0].mxu0 %v1347
      %v1349 = vpop.f32.mrb[0].mxu0
      %v1350 = vadd.f32 %v1001, %v1349
      %v1351 = vpop.f32.mrb[0].mxu0
      %1352 = vmatprep.mubr.f32.mxu0 0.0
      %v1353 = vand.u32 %v742, 4294901760
      %1354 = vmatmul.mubr.f32.gmra.mrb[0].mxu0 %v1353
      %v1355 = vpop.f32.mrb[0].mxu0
      %v1356 = vadd.f32 %v1011, %v1355
      %v1357 = vpop.f32.mrb[0].mxu0
      %1358 = vmatprep.mubr.f32.mxu0 0.0
      %v1359 = vand.u32 %v745, 4294901760
      %1360 = vmatmul.mubr.f32.gmra.mrb[0].mxu0 %v1359
      %v1361 = vpop.f32.mrb[0].mxu0
      %v1362 = vadd.f32 %v1021, %v1361
      %v1363 = vpop.f32.mrb[0].mxu0
      %1364 = vmatprep.mubr.f32.mxu0 0.0
      %v1365 = vand.u32 %v748, 4294901760
      %1366 = vmatmul.mubr.f32.gmra.mrb[0].mxu0 %v1365
      %v1367 = vpop.f32.mrb[0].mxu0
      %v1368 = vadd.f32 %v1031, %v1367
      %v1369 = vpop.f32.mrb[0].mxu0
      %1370 = vmatprep.mubr.f32.mxu0 0.0
      %v1371 = vand.u32 %v751, 4294901760
      %1372 = vmatmul.mubr.f32.gmra.mrb[0].mxu0 %v1371
      %v1373 = vpop.f32.mrb[0].mxu0
      %v1374 = vadd.f32 %v1041, %v1373
      %v1375 = vpop.f32.mrb[0].mxu0
      %1376 = vmatprep.mubr.f32.mxu0 0.0
      %v1377 = vand.u32 %v754, 4294901760
      %1378 = vmatmul.mubr.f32.gmra.mrb[0].mxu0 %v1377
      %v1379 = vpop.f32.mrb[0].mxu0
      %v1380 = vadd.f32 %v1051, %v1379
      %v1381 = vpop.f32.mrb[0].mxu0
      %1382 = vmatprep.mubr.f32.mxu0 0.0
      %v1383 = vand.u32 %v757, 4294901760
      %1384 = vmatmul.mubr.f32.gmra.mrb[0].mxu0 %v1383
      %v1385 = vpop.f32.mrb[0].mxu0
      %v1386 = vadd.f32 %v1061, %v1385
      %v1387 = vpop.f32.mrb[0].mxu0
      %1388 = vmatprep.mubr.f32.mxu0 0.0
      %v1389 = vand.u32 %v760, 4294901760
      %1390 = vmatmul.mubr.f32.gmra.mrb[0].mxu0 %v1389
      %v1391 = vpop.f32.mrb[0].mxu0
      %v1392 = vadd.f32 %v1071, %v1391
      %v1393 = vpop.f32.mrb[0].mxu0
      %1394 = vmatprep.mubr.f32.mxu0 0.0
      %v1395 = vand.u32 %v763, 4294901760
      %1396 = vmatmul.mubr.f32.gmra.mrb[0].mxu0 %v1395
      %v1397 = vpop.f32.mrb[0].mxu0
      %v1398 = vadd.f32 %v1081, %v1397
      %v1399 = vpop.f32.mrb[0].mxu0
      %1400 = vmatprep.mubr.f32.mxu0 0.0
      %v1401 = vand.u32 %v766, 4294901760
      %1402 = vmatmul.mubr.f32.gmra.mrb[0].mxu0 %v1401
      %v1403 = vpop.f32.mrb[0].mxu0
      %v1404 = vadd.f32 %v1091, %v1403
      %v1405 = vpop.f32.mrb[0].mxu0
      %1406 = vmatprep.mubr.f32.mxu0 0.0
      %v1407 = vand.u32 %v769, 4294901760
      %1408 = vmatmul.mubr.f32.gmra.mrb[0].mxu0 %v1407
      %v1409 = vpop.f32.mrb[0].mxu0
      %v1410 = vadd.f32 %v1101, %v1409
      %v1411 = vpop.f32.mrb[0].mxu0
      %1412 = vmatprep.mubr.f32.mxu0 0.0
      %v1413 = vand.u32 %v772, 4294901760
      %1414 = vmatmul.mubr.f32.gmra.mrb[0].mxu0 %v1413
      %v1415 = vpop.f32.mrb[0].mxu0
      %v1416 = vadd.f32 %v1111, %v1415
      %v1417 = vpop.f32.mrb[0].mxu0
      %1418 = vmatprep.mubr.f32.mxu0 0.0
      %v1419 = vand.u32 %v775, 4294901760
      %1420 = vmatmul.mubr.f32.gmra.mrb[0].mxu0 %v1419
      %v1421 = vpop.f32.mrb[0].mxu0
      %v1422 = vadd.f32 %v1121, %v1421
      %v1423 = vpop.f32.mrb[0].mxu0
      %1424 = vmatprep.mubr.f32.mxu0 0.0
      %v1425 = vand.u32 %v778, 4294901760
      %1426 = vmatmul.mubr.f32.gmra.mrb[0].mxu0 %v1425
      %v1427 = vpop.f32.mrb[0].mxu0
      %v1428 = vadd.f32 %v1131, %v1427
      %v1429 = vpop.f32.mrb[0].mxu0
      %1430 = vmatprep.mubr.f32.mxu0 0.0
      %v1431 = vand.u32 %v781, 4294901760
      %1432 = vmatmul.mubr.f32.gmra.mrb[0].mxu0 %v1431
      %v1433 = vpop.f32.mrb[0].mxu0
      %v1434 = vadd.f32 %v1141, %v1433
      %v1435 = vpop.f32.mrb[0].mxu0
      %1436 = vmatprep.mubr.f32.mxu0 0.0
      %v1437 = vand.u32 %v784, 4294901760
      %1438 = vmatmul.mubr.f32.gmra.mrb[0].mxu0 %v1437
      %v1439 = vpop.f32.mrb[0].mxu0
      %v1440 = vadd.f32 %v1151, %v1439
      %v1441 = vpop.f32.mrb[0].mxu0
      %1442 = vmatprep.mubr.f32.mxu0 0.0
      %v1443 = vand.u32 %v787, 4294901760
      %1444 = vmatmul.mubr.f32.gmra.mrb[0].mxu0 %v1443
      %v1445 = vpop.f32.mrb[0].mxu0
      %v1446 = vadd.f32 %v1161, %v1445
      %v1447 = vpop.f32.mrb[0].mxu0
      %1448 = vmatprep.mubr.f32.mxu0 0.0
      %v1449 = vand.u32 %v790, 4294901760
      %1450 = vmatmul.mubr.f32.gmra.mrb[0].mxu0 %v1449
      %v1451 = vpop.f32.mrb[0].mxu0
      %v1452 = vadd.f32 %v1171, %v1451
      %v1453 = vpop.f32.mrb[0].mxu0
      %1454 = vmatprep.mubr.f32.mxu0 0.0
      %v1455 = vand.u32 %v793, 4294901760
      %1456 = vmatmul.mubr.f32.gmra.mrb[0].mxu0 %v1455
      %v1457 = vpop.f32.mrb[0].mxu0
      %v1458 = vadd.f32 %v1181, %v1457
      %v1459 = vpop.f32.mrb[0].mxu0
      %1460 = vdwg.mxu0
      %1461 = vmatprep.subr.mxu0 0.0
      %v1462 = vand.u32 %v688, 4294901760
      %v1463 = vsub.f32 %v688, %v1462
      %1464 = vmatpush1.msra.mxu0 %v1463
      %1465 = vmatprep.subr.mxu0 0.0
      %v1466 = vand.u32 %v689, 4294901760
      %v1467 = vsub.f32 %v689, %v1466
      %1468 = vmatpush1.msra.mxu0 %v1467
      %1469 = vmatprep.subr.mxu0 0.0
      %v1470 = vand.u32 %v690, 4294901760
      %v1471 = vsub.f32 %v690, %v1470
      %1472 = vmatpush1.msra.mxu0 %v1471
      %1473 = vmatprep.subr.mxu0 0.0
      %v1474 = vand.u32 %v691, 4294901760
      %v1475 = vsub.f32 %v691, %v1474
      %1476 = vmatpush1.msra.mxu0 %v1475
      %1477 = vmatprep.subr.mxu0 0.0
      %1478 = vmatpush1.msra.mxu0 0.0
      %1479 = vmatprep.subr.mxu0 0.0
      %1480 = vmatpush1.msra.mxu0 0.0
      %1481 = vmatprep.subr.mxu0 0.0
      %1482 = vmatpush1.msra.mxu0 0.0
      %1483 = vmatprep.subr.mxu0 0.0
      %1484 = vmatpush1.msra.mxu0 0.0
      %1485 = vmatprep.subr.mxu0 0.0
      %1486 = vmatpush1.msra.mxu0 0.0
      %1487 = vmatprep.subr.mxu0 0.0
      %1488 = vmatpush1.msra.mxu0 0.0
      %1489 = vmatprep.subr.mxu0 0.0
      %1490 = vmatpush1.msra.mxu0 0.0
      %1491 = vmatprep.subr.mxu0 0.0
      %1492 = vmatpush1.msra.mxu0 0.0
      %1493 = vmatprep.subr.mxu0 0.0
      %1494 = vmatpush1.msra.mxu0 0.0
      %1495 = vmatprep.subr.mxu0 0.0
      %1496 = vmatpush1.msra.mxu0 0.0
      %1497 = vmatprep.subr.mxu0 0.0
      %1498 = vmatpush1.msra.mxu0 0.0
      %1499 = vmatprep.subr.mxu0 0.0
      %1500 = vmatpush1.msra.mxu0 0.0
      %1501 = vmatprep.subr.mxu0 0.0
      %1502 = vmatpush1.msra.mxu0 0.0
      %1503 = vmatprep.subr.mxu0 0.0
      %1504 = vmatpush1.msra.mxu0 0.0
      %1505 = vmatprep.subr.mxu0 0.0
      %1506 = vmatpush1.msra.mxu0 0.0
      %1507 = vmatprep.subr.mxu0 0.0
      %1508 = vmatpush1.msra.mxu0 0.0
      %1509 = vmatprep.subr.mxu0 0.0
      %1510 = vmatpush1.msra.mxu0 0.0
      %1511 = vmatprep.subr.mxu0 0.0
      %1512 = vmatpush1.msra.mxu0 0.0
      %1513 = vmatprep.subr.mxu0 0.0
      %1514 = vmatpush1.msra.mxu0 0.0
      %1515 = vmatprep.subr.mxu0 0.0
      %1516 = vmatpush1.msra.mxu0 0.0
      %1517 = vmatprep.subr.mxu0 0.0
      %1518 = vmatpush1.msra.mxu0 0.0
      %1519 = vmatprep.subr.mxu0 0.0
      %1520 = vmatpush1.msra.mxu0 0.0
      %1521 = vmatprep.subr.mxu0 0.0
      %1522 = vmatpush1.msra.mxu0 0.0
      %1523 = vmatprep.subr.mxu0 0.0
      %1524 = vmatpush1.msra.mxu0 0.0
      %1525 = vmatprep.subr.mxu0 0.0
      %1526 = vmatpush1.msra.mxu0 0.0
      %1527 = vmatprep.subr.mxu0 0.0
      %1528 = vmatpush1.msra.mxu0 0.0
      %1529 = vmatprep.subr.mxu0 0.0
      %1530 = vmatpush1.msra.mxu0 0.0
      %1531 = vmatprep.subr.mxu0 0.0
      %1532 = vmatpush1.msra.mxu0 0.0
      %1533 = vmatprep.mubr.f32.mxu0 0.0
      %v1534 = vand.u32 %v700, 4294901760
      %v1535 = vsub.f32 %v700, %v1534
      %1536 = vmatmul.mubr.f32.gmra.mrb[0].mxu0 %v1535
      %v1537 = vpop.f32.mrb[0].mxu0
      %v1538 = vadd.f32 %v1272, %v1537
      %v1539 = vpop.f32.mrb[0].mxu0
      %1540 = vmatprep.mubr.f32.mxu0 0.0
      %v1541 = vand.u32 %v703, 4294901760
      %v1542 = vsub.f32 %v703, %v1541
      %1543 = vmatmul.mubr.f32.gmra.mrb[0].mxu0 %v1542
      %v1544 = vpop.f32.mrb[0].mxu0
      %v1545 = vadd.f32 %v1278, %v1544
      %v1546 = vpop.f32.mrb[0].mxu0
      %1547 = vmatprep.mubr.f32.mxu0 0.0
      %v1548 = vand.u32 %v706, 4294901760
      %v1549 = vsub.f32 %v706, %v1548
      %1550 = vmatmul.mubr.f32.gmra.mrb[0].mxu0 %v1549
      %v1551 = vpop.f32.mrb[0].mxu0
      %v1552 = vadd.f32 %v1284, %v1551
      %v1553 = vpop.f32.mrb[0].mxu0
      %1554 = vmatprep.mubr.f32.mxu0 0.0
      %v1555 = vand.u32 %v709, 4294901760
      %v1556 = vsub.f32 %v709, %v1555
      %1557 = vmatmul.mubr.f32.gmra.mrb[0].mxu0 %v1556
      %v1558 = vpop.f32.mrb[0].mxu0
      %v1559 = vadd.f32 %v1290, %v1558
      %v1560 = vpop.f32.mrb[0].mxu0
      %1561 = vmatprep.mubr.f32.mxu0 0.0
      %v1562 = vand.u32 %v712, 4294901760
      %v1563 = vsub.f32 %v712, %v1562
      %1564 = vmatmul.mubr.f32.gmra.mrb[0].mxu0 %v1563
      %v1565 = vpop.f32.mrb[0].mxu0
      %v1566 = vadd.f32 %v1296, %v1565
      %v1567 = vpop.f32.mrb[0].mxu0
      %1568 = vmatprep.mubr.f32.mxu0 0.0
      %v1569 = vand.u32 %v715, 4294901760
      %v1570 = vsub.f32 %v715, %v1569
      %1571 = vmatmul.mubr.f32.gmra.mrb[0].mxu0 %v1570
      %v1572 = vpop.f32.mrb[0].mxu0
      %v1573 = vadd.f32 %v1302, %v1572
      %v1574 = vpop.f32.mrb[0].mxu0
      %1575 = vmatprep.mubr.f32.mxu0 0.0
      %v1576 = vand.u32 %v718, 4294901760
      %v1577 = vsub.f32 %v718, %v1576
      %1578 = vmatmul.mubr.f32.gmra.mrb[0].mxu0 %v1577
      %v1579 = vpop.f32.mrb[0].mxu0
      %v1580 = vadd.f32 %v1308, %v1579
      %v1581 = vpop.f32.mrb[0].mxu0
      %1582 = vmatprep.mubr.f32.mxu0 0.0
      %v1583 = vand.u32 %v721, 4294901760
      %v1584 = vsub.f32 %v721, %v1583
      %1585 = vmatmul.mubr.f32.gmra.mrb[0].mxu0 %v1584
      %v1586 = vpop.f32.mrb[0].mxu0
      %v1587 = vadd.f32 %v1314, %v1586
      %v1588 = vpop.f32.mrb[0].mxu0
      %1589 = vmatprep.mubr.f32.mxu0 0.0
      %v1590 = vand.u32 %v724, 4294901760
      %v1591 = vsub.f32 %v724, %v1590
      %1592 = vmatmul.mubr.f32.gmra.mrb[0].mxu0 %v1591
      %v1593 = vpop.f32.mrb[0].mxu0
      %v1594 = vadd.f32 %v1320, %v1593
      %v1595 = vpop.f32.mrb[0].mxu0
      %1596 = vmatprep.mubr.f32.mxu0 0.0
      %v1597 = vand.u32 %v727, 4294901760
      %v1598 = vsub.f32 %v727, %v1597
      %1599 = vmatmul.mubr.f32.gmra.mrb[0].mxu0 %v1598
      %v1600 = vpop.f32.mrb[0].mxu0
      %v1601 = vadd.f32 %v1326, %v1600
      %v1602 = vpop.f32.mrb[0].mxu0
      %1603 = vmatprep.mubr.f32.mxu0 0.0
      %v1604 = vand.u32 %v730, 4294901760
      %v1605 = vsub.f32 %v730, %v1604
      %1606 = vmatmul.mubr.f32.gmra.mrb[0].mxu0 %v1605
      %v1607 = vpop.f32.mrb[0].mxu0
      %v1608 = vadd.f32 %v1332, %v1607
      %v1609 = vpop.f32.mrb[0].mxu0
      %1610 = vmatprep.mubr.f32.mxu0 0.0
      %v1611 = vand.u32 %v733, 4294901760
      %v1612 = vsub.f32 %v733, %v1611
      %1613 = vmatmul.mubr.f32.gmra.mrb[0].mxu0 %v1612
      %v1614 = vpop.f32.mrb[0].mxu0
      %v1615 = vadd.f32 %v1338, %v1614
      %v1616 = vpop.f32.mrb[0].mxu0
      %1617 = vmatprep.mubr.f32.mxu0 0.0
      %v1618 = vand.u32 %v736, 4294901760
      %v1619 = vsub.f32 %v736, %v1618
      %1620 = vmatmul.mubr.f32.gmra.mrb[0].mxu0 %v1619
      %v1621 = vpop.f32.mrb[0].mxu0
      %v1622 = vadd.f32 %v1344, %v1621
      %v1623 = vpop.f32.mrb[0].mxu0
      %1624 = vmatprep.mubr.f32.mxu0 0.0
      %v1625 = vand.u32 %v739, 4294901760
      %v1626 = vsub.f32 %v739, %v1625
      %1627 = vmatmul.mubr.f32.gmra.mrb[0].mxu0 %v1626
      %v1628 = vpop.f32.mrb[0].mxu0
      %v1629 = vadd.f32 %v1350, %v1628
      %v1630 = vpop.f32.mrb[0].mxu0
      %1631 = vmatprep.mubr.f32.mxu0 0.0
      %v1632 = vand.u32 %v742, 4294901760
      %v1633 = vsub.f32 %v742, %v1632
      %1634 = vmatmul.mubr.f32.gmra.mrb[0].mxu0 %v1633
      %v1635 = vpop.f32.mrb[0].mxu0
      %v1636 = vadd.f32 %v1356, %v1635
      %v1637 = vpop.f32.mrb[0].mxu0
      %1638 = vmatprep.mubr.f32.mxu0 0.0
      %v1639 = vand.u32 %v745, 4294901760
      %v1640 = vsub.f32 %v745, %v1639
      %1641 = vmatmul.mubr.f32.gmra.mrb[0].mxu0 %v1640
      %v1642 = vpop.f32.mrb[0].mxu0
      %v1643 = vadd.f32 %v1362, %v1642
      %v1644 = vpop.f32.mrb[0].mxu0
      %1645 = vmatprep.mubr.f32.mxu0 0.0
      %v1646 = vand.u32 %v748, 4294901760
      %v1647 = vsub.f32 %v748, %v1646
      %1648 = vmatmul.mubr.f32.gmra.mrb[0].mxu0 %v1647
      %v1649 = vpop.f32.mrb[0].mxu0
      %v1650 = vadd.f32 %v1368, %v1649
      %v1651 = vpop.f32.mrb[0].mxu0
      %1652 = vmatprep.mubr.f32.mxu0 0.0
      %v1653 = vand.u32 %v751, 4294901760
      %v1654 = vsub.f32 %v751, %v1653
      %1655 = vmatmul.mubr.f32.gmra.mrb[0].mxu0 %v1654
      %v1656 = vpop.f32.mrb[0].mxu0
      %v1657 = vadd.f32 %v1374, %v1656
      %v1658 = vpop.f32.mrb[0].mxu0
      %1659 = vmatprep.mubr.f32.mxu0 0.0
      %v1660 = vand.u32 %v754, 4294901760
      %v1661 = vsub.f32 %v754, %v1660
      %1662 = vmatmul.mubr.f32.gmra.mrb[0].mxu0 %v1661
      %v1663 = vpop.f32.mrb[0].mxu0
      %v1664 = vadd.f32 %v1380, %v1663
      %v1665 = vpop.f32.mrb[0].mxu0
      %1666 = vmatprep.mubr.f32.mxu0 0.0
      %v1667 = vand.u32 %v757, 4294901760
      %v1668 = vsub.f32 %v757, %v1667
      %1669 = vmatmul.mubr.f32.gmra.mrb[0].mxu0 %v1668
      %v1670 = vpop.f32.mrb[0].mxu0
      %v1671 = vadd.f32 %v1386, %v1670
      %v1672 = vpop.f32.mrb[0].mxu0
      %1673 = vmatprep.mubr.f32.mxu0 0.0
      %v1674 = vand.u32 %v760, 4294901760
      %v1675 = vsub.f32 %v760, %v1674
      %1676 = vmatmul.mubr.f32.gmra.mrb[0].mxu0 %v1675
      %v1677 = vpop.f32.mrb[0].mxu0
      %v1678 = vadd.f32 %v1392, %v1677
      %v1679 = vpop.f32.mrb[0].mxu0
      %1680 = vmatprep.mubr.f32.mxu0 0.0
      %v1681 = vand.u32 %v763, 4294901760
      %v1682 = vsub.f32 %v763, %v1681
      %1683 = vmatmul.mubr.f32.gmra.mrb[0].mxu0 %v1682
      %v1684 = vpop.f32.mrb[0].mxu0
      %v1685 = vadd.f32 %v1398, %v1684
      %v1686 = vpop.f32.mrb[0].mxu0
      %1687 = vmatprep.mubr.f32.mxu0 0.0
      %v1688 = vand.u32 %v766, 4294901760
      %v1689 = vsub.f32 %v766, %v1688
      %1690 = vmatmul.mubr.f32.gmra.mrb[0].mxu0 %v1689
      %v1691 = vpop.f32.mrb[0].mxu0
      %v1692 = vadd.f32 %v1404, %v1691
      %v1693 = vpop.f32.mrb[0].mxu0
      %1694 = vmatprep.mubr.f32.mxu0 0.0
      %v1695 = vand.u32 %v769, 4294901760
      %v1696 = vsub.f32 %v769, %v1695
      %1697 = vmatmul.mubr.f32.gmra.mrb[0].mxu0 %v1696
      %v1698 = vpop.f32.mrb[0].mxu0
      %v1699 = vadd.f32 %v1410, %v1698
      %v1700 = vpop.f32.mrb[0].mxu0
      %1701 = vmatprep.mubr.f32.mxu0 0.0
      %v1702 = vand.u32 %v772, 4294901760
      %v1703 = vsub.f32 %v772, %v1702
      %1704 = vmatmul.mubr.f32.gmra.mrb[0].mxu0 %v1703
      %v1705 = vpop.f32.mrb[0].mxu0
      %v1706 = vadd.f32 %v1416, %v1705
      %v1707 = vpop.f32.mrb[0].mxu0
      %1708 = vmatprep.mubr.f32.mxu0 0.0
      %v1709 = vand.u32 %v775, 4294901760
      %v1710 = vsub.f32 %v775, %v1709
      %1711 = vmatmul.mubr.f32.gmra.mrb[0].mxu0 %v1710
      %v1712 = vpop.f32.mrb[0].mxu0
      %v1713 = vadd.f32 %v1422, %v1712
      %v1714 = vpop.f32.mrb[0].mxu0
      %1715 = vmatprep.mubr.f32.mxu0 0.0
      %v1716 = vand.u32 %v778, 4294901760
      %v1717 = vsub.f32 %v778, %v1716
      %1718 = vmatmul.mubr.f32.gmra.mrb[0].mxu0 %v1717
      %v1719 = vpop.f32.mrb[0].mxu0
      %v1720 = vadd.f32 %v1428, %v1719
      %v1721 = vpop.f32.mrb[0].mxu0
      %1722 = vmatprep.mubr.f32.mxu0 0.0
      %v1723 = vand.u32 %v781, 4294901760
      %v1724 = vsub.f32 %v781, %v1723
      %1725 = vmatmul.mubr.f32.gmra.mrb[0].mxu0 %v1724
      %v1726 = vpop.f32.mrb[0].mxu0
      %v1727 = vadd.f32 %v1434, %v1726
      %v1728 = vpop.f32.mrb[0].mxu0
      %1729 = vmatprep.mubr.f32.mxu0 0.0
      %v1730 = vand.u32 %v784, 4294901760
      %v1731 = vsub.f32 %v784, %v1730
      %1732 = vmatmul.mubr.f32.gmra.mrb[0].mxu0 %v1731
      %v1733 = vpop.f32.mrb[0].mxu0
      %v1734 = vadd.f32 %v1440, %v1733
      %v1735 = vpop.f32.mrb[0].mxu0
      %1736 = vmatprep.mubr.f32.mxu0 0.0
      %v1737 = vand.u32 %v787, 4294901760
      %v1738 = vsub.f32 %v787, %v1737
      %1739 = vmatmul.mubr.f32.gmra.mrb[0].mxu0 %v1738
      %v1740 = vpop.f32.mrb[0].mxu0
      %v1741 = vadd.f32 %v1446, %v1740
      %v1742 = vpop.f32.mrb[0].mxu0
      %1743 = vmatprep.mubr.f32.mxu0 0.0
      %v1744 = vand.u32 %v790, 4294901760
      %v1745 = vsub.f32 %v790, %v1744
      %1746 = vmatmul.mubr.f32.gmra.mrb[0].mxu0 %v1745
      %v1747 = vpop.f32.mrb[0].mxu0
      %v1748 = vadd.f32 %v1452, %v1747
      %v1749 = vpop.f32.mrb[0].mxu0
      %1750 = vmatprep.mubr.f32.mxu0 0.0
      %v1751 = vand.u32 %v793, 4294901760
      %v1752 = vsub.f32 %v793, %v1751
      %1753 = vmatmul.mubr.f32.gmra.mrb[0].mxu0 %v1752
      %v1754 = vpop.f32.mrb[0].mxu0
      %v1755 = vadd.f32 %v1458, %v1754
      %v1756 = vpop.f32.mrb[0].mxu0
      %1757 = vdwg.mxu0
      %1758 = vmatprep.subr.mxu0 0.0
      %v1759 = vand.u32 %v688, 4294901760
      %1760 = vmatpush1.msra.mxu0 %v1759
      %1761 = vmatprep.subr.mxu0 0.0
      %v1762 = vand.u32 %v689, 4294901760
      %1763 = vmatpush1.msra.mxu0 %v1762
      %1764 = vmatprep.subr.mxu0 0.0
      %v1765 = vand.u32 %v690, 4294901760
      %1766 = vmatpush1.msra.mxu0 %v1765
      %1767 = vmatprep.subr.mxu0 0.0
      %v1768 = vand.u32 %v691, 4294901760
      %1769 = vmatpush1.msra.mxu0 %v1768
      %1770 = vmatprep.subr.mxu0 0.0
      %1771 = vmatpush1.msra.mxu0 0.0
      %1772 = vmatprep.subr.mxu0 0.0
      %1773 = vmatpush1.msra.mxu0 0.0
      %1774 = vmatprep.subr.mxu0 0.0
      %1775 = vmatpush1.msra.mxu0 0.0
      %1776 = vmatprep.subr.mxu0 0.0
      %1777 = vmatpush1.msra.mxu0 0.0
      %1778 = vmatprep.subr.mxu0 0.0
      %1779 = vmatpush1.msra.mxu0 0.0
      %1780 = vmatprep.subr.mxu0 0.0
      %1781 = vmatpush1.msra.mxu0 0.0
      %1782 = vmatprep.subr.mxu0 0.0
      %1783 = vmatpush1.msra.mxu0 0.0
      %1784 = vmatprep.subr.mxu0 0.0
      %1785 = vmatpush1.msra.mxu0 0.0
      %1786 = vmatprep.subr.mxu0 0.0
      %1787 = vmatpush1.msra.mxu0 0.0
      %1788 = vmatprep.subr.mxu0 0.0
      %1789 = vmatpush1.msra.mxu0 0.0
      %1790 = vmatprep.subr.mxu0 0.0
      %1791 = vmatpush1.msra.mxu0 0.0
      %1792 = vmatprep.subr.mxu0 0.0
      %1793 = vmatpush1.msra.mxu0 0.0
      %1794 = vmatprep.subr.mxu0 0.0
      %1795 = vmatpush1.msra.mxu0 0.0
      %1796 = vmatprep.subr.mxu0 0.0
      %1797 = vmatpush1.msra.mxu0 0.0
      %1798 = vmatprep.subr.mxu0 0.0
      %1799 = vmatpush1.msra.mxu0 0.0
      %1800 = vmatprep.subr.mxu0 0.0
      %1801 = vmatpush1.msra.mxu0 0.0
      %1802 = vmatprep.subr.mxu0 0.0
      %1803 = vmatpush1.msra.mxu0 0.0
      %1804 = vmatprep.subr.mxu0 0.0
      %1805 = vmatpush1.msra.mxu0 0.0
      %1806 = vmatprep.subr.mxu0 0.0
      %1807 = vmatpush1.msra.mxu0 0.0
      %1808 = vmatprep.subr.mxu0 0.0
      %1809 = vmatpush1.msra.mxu0 0.0
      %1810 = vmatprep.subr.mxu0 0.0
      %1811 = vmatpush1.msra.mxu0 0.0
      %1812 = vmatprep.subr.mxu0 0.0
      %1813 = vmatpush1.msra.mxu0 0.0
      %1814 = vmatprep.subr.mxu0 0.0
      %1815 = vmatpush1.msra.mxu0 0.0
      %1816 = vmatprep.subr.mxu0 0.0
      %1817 = vmatpush1.msra.mxu0 0.0
      %1818 = vmatprep.subr.mxu0 0.0
      %1819 = vmatpush1.msra.mxu0 0.0
      %1820 = vmatprep.subr.mxu0 0.0
      %1821 = vmatpush1.msra.mxu0 0.0
      %1822 = vmatprep.subr.mxu0 0.0
      %1823 = vmatpush1.msra.mxu0 0.0
      %1824 = vmatprep.subr.mxu0 0.0
      %1825 = vmatpush1.msra.mxu0 0.0
      %1826 = vmatprep.mubr.f32.mxu0 0.0
      %v1827 = vand.u32 %v700, 4294901760
      %v1828 = vsub.f32 %v700, %v1827
      %v1829 = vand.u32 %v1828, 4294901760
      %1830 = vmatmul.mubr.f32.gmra.mrb[0].mxu0 %v1829
      %v1831 = vpop.f32.mrb[0].mxu0
      %v1832 = vadd.f32 %v1538, %v1831
      %v1833 = vpop.f32.mrb[0].mxu0
      %1834 = vmatprep.mubr.f32.mxu0 0.0
      %v1835 = vand.u32 %v703, 4294901760
      %v1836 = vsub.f32 %v703, %v1835
      %v1837 = vand.u32 %v1836, 4294901760
      %1838 = vmatmul.mubr.f32.gmra.mrb[0].mxu0 %v1837
      %v1839 = vpop.f32.mrb[0].mxu0
      %v1840 = vadd.f32 %v1545, %v1839
      %v1841 = vpop.f32.mrb[0].mxu0
      %1842 = vmatprep.mubr.f32.mxu0 0.0
      %v1843 = vand.u32 %v706, 4294901760
      %v1844 = vsub.f32 %v706, %v1843
      %v1845 = vand.u32 %v1844, 4294901760
      %1846 = vmatmul.mubr.f32.gmra.mrb[0].mxu0 %v1845
      %v1847 = vpop.f32.mrb[0].mxu0
      %v1848 = vadd.f32 %v1552, %v1847
      %v1849 = vpop.f32.mrb[0].mxu0
      %1850 = vmatprep.mubr.f32.mxu0 0.0
      %v1851 = vand.u32 %v709, 4294901760
      %v1852 = vsub.f32 %v709, %v1851
      %v1853 = vand.u32 %v1852, 4294901760
      %1854 = vmatmul.mubr.f32.gmra.mrb[0].mxu0 %v1853
      %v1855 = vpop.f32.mrb[0].mxu0
      %v1856 = vadd.f32 %v1559, %v1855
      %v1857 = vpop.f32.mrb[0].mxu0
      %1858 = vmatprep.mubr.f32.mxu0 0.0
      %v1859 = vand.u32 %v712, 4294901760
      %v1860 = vsub.f32 %v712, %v1859
      %v1861 = vand.u32 %v1860, 4294901760
      %1862 = vmatmul.mubr.f32.gmra.mrb[0].mxu0 %v1861
      %v1863 = vpop.f32.mrb[0].mxu0
      %v1864 = vadd.f32 %v1566, %v1863
      %v1865 = vpop.f32.mrb[0].mxu0
      %1866 = vmatprep.mubr.f32.mxu0 0.0
      %v1867 = vand.u32 %v715, 4294901760
      %v1868 = vsub.f32 %v715, %v1867
      %v1869 = vand.u32 %v1868, 4294901760
      %1870 = vmatmul.mubr.f32.gmra.mrb[0].mxu0 %v1869
      %v1871 = vpop.f32.mrb[0].mxu0
      %v1872 = vadd.f32 %v1573, %v1871
      %v1873 = vpop.f32.mrb[0].mxu0
      %1874 = vmatprep.mubr.f32.mxu0 0.0
      %v1875 = vand.u32 %v718, 4294901760
      %v1876 = vsub.f32 %v718, %v1875
      %v1877 = vand.u32 %v1876, 4294901760
      %1878 = vmatmul.mubr.f32.gmra.mrb[0].mxu0 %v1877
      %v1879 = vpop.f32.mrb[0].mxu0
      %v1880 = vadd.f32 %v1580, %v1879
      %v1881 = vpop.f32.mrb[0].mxu0
      %1882 = vmatprep.mubr.f32.mxu0 0.0
      %v1883 = vand.u32 %v721, 4294901760
      %v1884 = vsub.f32 %v721, %v1883
      %v1885 = vand.u32 %v1884, 4294901760
      %1886 = vmatmul.mubr.f32.gmra.mrb[0].mxu0 %v1885
      %v1887 = vpop.f32.mrb[0].mxu0
      %v1888 = vadd.f32 %v1587, %v1887
      %v1889 = vpop.f32.mrb[0].mxu0
      %1890 = vmatprep.mubr.f32.mxu0 0.0
      %v1891 = vand.u32 %v724, 4294901760
      %v1892 = vsub.f32 %v724, %v1891
      %v1893 = vand.u32 %v1892, 4294901760
      %1894 = vmatmul.mubr.f32.gmra.mrb[0].mxu0 %v1893
      %v1895 = vpop.f32.mrb[0].mxu0
      %v1896 = vadd.f32 %v1594, %v1895
      %v1897 = vpop.f32.mrb[0].mxu0
      %1898 = vmatprep.mubr.f32.mxu0 0.0
      %v1899 = vand.u32 %v727, 4294901760
      %v1900 = vsub.f32 %v727, %v1899
      %v1901 = vand.u32 %v1900, 4294901760
      %1902 = vmatmul.mubr.f32.gmra.mrb[0].mxu0 %v1901
      %v1903 = vpop.f32.mrb[0].mxu0
      %v1904 = vadd.f32 %v1601, %v1903
      %v1905 = vpop.f32.mrb[0].mxu0
      %1906 = vmatprep.mubr.f32.mxu0 0.0
      %v1907 = vand.u32 %v730, 4294901760
      %v1908 = vsub.f32 %v730, %v1907
      %v1909 = vand.u32 %v1908, 4294901760
      %1910 = vmatmul.mubr.f32.gmra.mrb[0].mxu0 %v1909
      %v1911 = vpop.f32.mrb[0].mxu0
      %v1912 = vadd.f32 %v1608, %v1911
      %v1913 = vpop.f32.mrb[0].mxu0
      %1914 = vmatprep.mubr.f32.mxu0 0.0
      %v1915 = vand.u32 %v733, 4294901760
      %v1916 = vsub.f32 %v733, %v1915
      %v1917 = vand.u32 %v1916, 4294901760
      %1918 = vmatmul.mubr.f32.gmra.mrb[0].mxu0 %v1917
      %v1919 = vpop.f32.mrb[0].mxu0
      %v1920 = vadd.f32 %v1615, %v1919
      %v1921 = vpop.f32.mrb[0].mxu0
      %1922 = vmatprep.mubr.f32.mxu0 0.0
      %v1923 = vand.u32 %v736, 4294901760
      %v1924 = vsub.f32 %v736, %v1923
      %v1925 = vand.u32 %v1924, 4294901760
      %1926 = vmatmul.mubr.f32.gmra.mrb[0].mxu0 %v1925
      %v1927 = vpop.f32.mrb[0].mxu0
      %v1928 = vadd.f32 %v1622, %v1927
      %v1929 = vpop.f32.mrb[0].mxu0
      %1930 = vmatprep.mubr.f32.mxu0 0.0
      %v1931 = vand.u32 %v739, 4294901760
      %v1932 = vsub.f32 %v739, %v1931
      %v1933 = vand.u32 %v1932, 4294901760
      %1934 = vmatmul.mubr.f32.gmra.mrb[0].mxu0 %v1933
      %v1935 = vpop.f32.mrb[0].mxu0
      %v1936 = vadd.f32 %v1629, %v1935
      %v1937 = vpop.f32.mrb[0].mxu0
      %1938 = vmatprep.mubr.f32.mxu0 0.0
      %v1939 = vand.u32 %v742, 4294901760
      %v1940 = vsub.f32 %v742, %v1939
      %v1941 = vand.u32 %v1940, 4294901760
      %1942 = vmatmul.mubr.f32.gmra.mrb[0].mxu0 %v1941
      %v1943 = vpop.f32.mrb[0].mxu0
      %v1944 = vadd.f32 %v1636, %v1943
      %v1945 = vpop.f32.mrb[0].mxu0
      %1946 = vmatprep.mubr.f32.mxu0 0.0
      %v1947 = vand.u32 %v745, 4294901760
      %v1948 = vsub.f32 %v745, %v1947
      %v1949 = vand.u32 %v1948, 4294901760
      %1950 = vmatmul.mubr.f32.gmra.mrb[0].mxu0 %v1949
      %v1951 = vpop.f32.mrb[0].mxu0
      %v1952 = vadd.f32 %v1643, %v1951
      %v1953 = vpop.f32.mrb[0].mxu0
      %1954 = vmatprep.mubr.f32.mxu0 0.0
      %v1955 = vand.u32 %v748, 4294901760
      %v1956 = vsub.f32 %v748, %v1955
      %v1957 = vand.u32 %v1956, 4294901760
      %1958 = vmatmul.mubr.f32.gmra.mrb[0].mxu0 %v1957
      %v1959 = vpop.f32.mrb[0].mxu0
      %v1960 = vadd.f32 %v1650, %v1959
      %v1961 = vpop.f32.mrb[0].mxu0
      %1962 = vmatprep.mubr.f32.mxu0 0.0
      %v1963 = vand.u32 %v751, 4294901760
      %v1964 = vsub.f32 %v751, %v1963
      %v1965 = vand.u32 %v1964, 4294901760
      %1966 = vmatmul.mubr.f32.gmra.mrb[0].mxu0 %v1965
      %v1967 = vpop.f32.mrb[0].mxu0
      %v1968 = vadd.f32 %v1657, %v1967
      %v1969 = vpop.f32.mrb[0].mxu0
      %1970 = vmatprep.mubr.f32.mxu0 0.0
      %v1971 = vand.u32 %v754, 4294901760
      %v1972 = vsub.f32 %v754, %v1971
      %v1973 = vand.u32 %v1972, 4294901760
      %1974 = vmatmul.mubr.f32.gmra.mrb[0].mxu0 %v1973
      %v1975 = vpop.f32.mrb[0].mxu0
      %v1976 = vadd.f32 %v1664, %v1975
      %v1977 = vpop.f32.mrb[0].mxu0
      %1978 = vmatprep.mubr.f32.mxu0 0.0
      %v1979 = vand.u32 %v757, 4294901760
      %v1980 = vsub.f32 %v757, %v1979
      %v1981 = vand.u32 %v1980, 4294901760
      %1982 = vmatmul.mubr.f32.gmra.mrb[0].mxu0 %v1981
      %v1983 = vpop.f32.mrb[0].mxu0
      %v1984 = vadd.f32 %v1671, %v1983
      %v1985 = vpop.f32.mrb[0].mxu0
      %1986 = vmatprep.mubr.f32.mxu0 0.0
      %v1987 = vand.u32 %v760, 4294901760
      %v1988 = vsub.f32 %v760, %v1987
      %v1989 = vand.u32 %v1988, 4294901760
      %1990 = vmatmul.mubr.f32.gmra.mrb[0].mxu0 %v1989
      %v1991 = vpop.f32.mrb[0].mxu0
      %v1992 = vadd.f32 %v1678, %v1991
      %v1993 = vpop.f32.mrb[0].mxu0
      %1994 = vmatprep.mubr.f32.mxu0 0.0
      %v1995 = vand.u32 %v763, 4294901760
      %v1996 = vsub.f32 %v763, %v1995
      %v1997 = vand.u32 %v1996, 4294901760
      %1998 = vmatmul.mubr.f32.gmra.mrb[0].mxu0 %v1997
      %v1999 = vpop.f32.mrb[0].mxu0
      %v2000 = vadd.f32 %v1685, %v1999
      %v2001 = vpop.f32.mrb[0].mxu0
      %2002 = vmatprep.mubr.f32.mxu0 0.0
      %v2003 = vand.u32 %v766, 4294901760
      %v2004 = vsub.f32 %v766, %v2003
      %v2005 = vand.u32 %v2004, 4294901760
      %2006 = vmatmul.mubr.f32.gmra.mrb[0].mxu0 %v2005
      %v2007 = vpop.f32.mrb[0].mxu0
      %v2008 = vadd.f32 %v1692, %v2007
      %v2009 = vpop.f32.mrb[0].mxu0
      %2010 = vmatprep.mubr.f32.mxu0 0.0
      %v2011 = vand.u32 %v769, 4294901760
      %v2012 = vsub.f32 %v769, %v2011
      %v2013 = vand.u32 %v2012, 4294901760
      %2014 = vmatmul.mubr.f32.gmra.mrb[0].mxu0 %v2013
      %v2015 = vpop.f32.mrb[0].mxu0
      %v2016 = vadd.f32 %v1699, %v2015
      %v2017 = vpop.f32.mrb[0].mxu0
      %2018 = vmatprep.mubr.f32.mxu0 0.0
      %v2019 = vand.u32 %v772, 4294901760
      %v2020 = vsub.f32 %v772, %v2019
      %v2021 = vand.u32 %v2020, 4294901760
      %2022 = vmatmul.mubr.f32.gmra.mrb[0].mxu0 %v2021
      %v2023 = vpop.f32.mrb[0].mxu0
      %v2024 = vadd.f32 %v1706, %v2023
      %v2025 = vpop.f32.mrb[0].mxu0
      %2026 = vmatprep.mubr.f32.mxu0 0.0
      %v2027 = vand.u32 %v775, 4294901760
      %v2028 = vsub.f32 %v775, %v2027
      %v2029 = vand.u32 %v2028, 4294901760
      %2030 = vmatmul.mubr.f32.gmra.mrb[0].mxu0 %v2029
      %v2031 = vpop.f32.mrb[0].mxu0
      %v2032 = vadd.f32 %v1713, %v2031
      %v2033 = vpop.f32.mrb[0].mxu0
      %2034 = vmatprep.mubr.f32.mxu0 0.0
      %v2035 = vand.u32 %v778, 4294901760
      %v2036 = vsub.f32 %v778, %v2035
      %v2037 = vand.u32 %v2036, 4294901760
      %2038 = vmatmul.mubr.f32.gmra.mrb[0].mxu0 %v2037
      %v2039 = vpop.f32.mrb[0].mxu0
      %v2040 = vadd.f32 %v1720, %v2039
      %v2041 = vpop.f32.mrb[0].mxu0
      %2042 = vmatprep.mubr.f32.mxu0 0.0
      %v2043 = vand.u32 %v781, 4294901760
      %v2044 = vsub.f32 %v781, %v2043
      %v2045 = vand.u32 %v2044, 4294901760
      %2046 = vmatmul.mubr.f32.gmra.mrb[0].mxu0 %v2045
      %v2047 = vpop.f32.mrb[0].mxu0
      %v2048 = vadd.f32 %v1727, %v2047
      %v2049 = vpop.f32.mrb[0].mxu0
      %2050 = vmatprep.mubr.f32.mxu0 0.0
      %v2051 = vand.u32 %v784, 4294901760
      %v2052 = vsub.f32 %v784, %v2051
      %v2053 = vand.u32 %v2052, 4294901760
      %2054 = vmatmul.mubr.f32.gmra.mrb[0].mxu0 %v2053
      %v2055 = vpop.f32.mrb[0].mxu0
      %v2056 = vadd.f32 %v1734, %v2055
      %v2057 = vpop.f32.mrb[0].mxu0
      %2058 = vmatprep.mubr.f32.mxu0 0.0
      %v2059 = vand.u32 %v787, 4294901760
      %v2060 = vsub.f32 %v787, %v2059
      %v2061 = vand.u32 %v2060, 4294901760
      %2062 = vmatmul.mubr.f32.gmra.mrb[0].mxu0 %v2061
      %v2063 = vpop.f32.mrb[0].mxu0
      %v2064 = vadd.f32 %v1741, %v2063
      %v2065 = vpop.f32.mrb[0].mxu0
      %2066 = vmatprep.mubr.f32.mxu0 0.0
      %v2067 = vand.u32 %v790, 4294901760
      %v2068 = vsub.f32 %v790, %v2067
      %v2069 = vand.u32 %v2068, 4294901760
      %2070 = vmatmul.mubr.f32.gmra.mrb[0].mxu0 %v2069
      %v2071 = vpop.f32.mrb[0].mxu0
      %v2072 = vadd.f32 %v1748, %v2071
      %v2073 = vpop.f32.mrb[0].mxu0
      %2074 = vmatprep.mubr.f32.mxu0 0.0
      %v2075 = vand.u32 %v793, 4294901760
      %v2076 = vsub.f32 %v793, %v2075
      %v2077 = vand.u32 %v2076, 4294901760
      %2078 = vmatmul.mubr.f32.gmra.mrb[0].mxu0 %v2077
      %v2079 = vpop.f32.mrb[0].mxu0
      %v2080 = vadd.f32 %v1755, %v2079
      %v2081 = vpop.f32.mrb[0].mxu0
      %2082 = vdwg.mxu0
      %2083 = vmatprep.subr.mxu0 0.0
      %v2084 = vand.u32 %v688, 4294901760
      %v2085 = vsub.f32 %v688, %v2084
      %v2086 = vand.u32 %v2085, 4294901760
      %2087 = vmatpush1.msra.mxu0 %v2086
      %2088 = vmatprep.subr.mxu0 0.0
      %v2089 = vand.u32 %v689, 4294901760
      %v2090 = vsub.f32 %v689, %v2089
      %v2091 = vand.u32 %v2090, 4294901760
      %2092 = vmatpush1.msra.mxu0 %v2091
      %2093 = vmatprep.subr.mxu0 0.0
      %v2094 = vand.u32 %v690, 4294901760
      %v2095 = vsub.f32 %v690, %v2094
      %v2096 = vand.u32 %v2095, 4294901760
      %2097 = vmatpush1.msra.mxu0 %v2096
      %2098 = vmatprep.subr.mxu0 0.0
      %v2099 = vand.u32 %v691, 4294901760
      %v2100 = vsub.f32 %v691, %v2099
      %v2101 = vand.u32 %v2100, 4294901760
      %2102 = vmatpush1.msra.mxu0 %v2101
      %2103 = vmatprep.subr.mxu0 0.0
      %2104 = vmatpush1.msra.mxu0 0.0
      %2105 = vmatprep.subr.mxu0 0.0
      %2106 = vmatpush1.msra.mxu0 0.0
      %2107 = vmatprep.subr.mxu0 0.0
      %2108 = vmatpush1.msra.mxu0 0.0
      %2109 = vmatprep.subr.mxu0 0.0
      %2110 = vmatpush1.msra.mxu0 0.0
      %2111 = vmatprep.subr.mxu0 0.0
      %2112 = vmatpush1.msra.mxu0 0.0
      %2113 = vmatprep.subr.mxu0 0.0
      %2114 = vmatpush1.msra.mxu0 0.0
      %2115 = vmatprep.subr.mxu0 0.0
      %2116 = vmatpush1.msra.mxu0 0.0
      %2117 = vmatprep.subr.mxu0 0.0
      %2118 = vmatpush1.msra.mxu0 0.0
      %2119 = vmatprep.subr.mxu0 0.0
      %2120 = vmatpush1.msra.mxu0 0.0
      %2121 = vmatprep.subr.mxu0 0.0
      %2122 = vmatpush1.msra.mxu0 0.0
      %2123 = vmatprep.subr.mxu0 0.0
      %2124 = vmatpush1.msra.mxu0 0.0
      %2125 = vmatprep.subr.mxu0 0.0
      %2126 = vmatpush1.msra.mxu0 0.0
      %2127 = vmatprep.subr.mxu0 0.0
      %2128 = vmatpush1.msra.mxu0 0.0
      %2129 = vmatprep.subr.mxu0 0.0
      %2130 = vmatpush1.msra.mxu0 0.0
      %2131 = vmatprep.subr.mxu0 0.0
      %2132 = vmatpush1.msra.mxu0 0.0
      %2133 = vmatprep.subr.mxu0 0.0
      %2134 = vmatpush1.msra.mxu0 0.0
      %2135 = vmatprep.subr.mxu0 0.0
      %2136 = vmatpush1.msra.mxu0 0.0
      %2137 = vmatprep.subr.mxu0 0.0
      %2138 = vmatpush1.msra.mxu0 0.0
      %2139 = vmatprep.subr.mxu0 0.0
      %2140 = vmatpush1.msra.mxu0 0.0
      %2141 = vmatprep.subr.mxu0 0.0
      %2142 = vmatpush1.msra.mxu0 0.0
      %2143 = vmatprep.subr.mxu0 0.0
      %2144 = vmatpush1.msra.mxu0 0.0
      %2145 = vmatprep.subr.mxu0 0.0
      %2146 = vmatpush1.msra.mxu0 0.0
      %2147 = vmatprep.subr.mxu0 0.0
      %2148 = vmatpush1.msra.mxu0 0.0
      %2149 = vmatprep.subr.mxu0 0.0
      %2150 = vmatpush1.msra.mxu0 0.0
      %2151 = vmatprep.subr.mxu0 0.0
      %2152 = vmatpush1.msra.mxu0 0.0
      %2153 = vmatprep.subr.mxu0 0.0
      %2154 = vmatpush1.msra.mxu0 0.0
      %2155 = vmatprep.subr.mxu0 0.0
      %2156 = vmatpush1.msra.mxu0 0.0
      %2157 = vmatprep.subr.mxu0 0.0
      %2158 = vmatpush1.msra.mxu0 0.0
      %2159 = vmatprep.mubr.f32.mxu0 0.0
      %v2160 = vand.u32 %v700, 4294901760
      %2161 = vmatmul.mubr.f32.gmra.mrb[0].mxu0 %v2160
      %v2162 = vpop.f32.mrb[0].mxu0
      %v2163 = vadd.f32 %v1832, %v2162
      %v2164 = vpop.f32.mrb[0].mxu0
      %2165 = vmatprep.mubr.f32.mxu0 0.0
      %v2166 = vand.u32 %v703, 4294901760
      %2167 = vmatmul.mubr.f32.gmra.mrb[0].mxu0 %v2166
      %v2168 = vpop.f32.mrb[0].mxu0
      %v2169 = vadd.f32 %v1840, %v2168
      %v2170 = vpop.f32.mrb[0].mxu0
      %2171 = vmatprep.mubr.f32.mxu0 0.0
      %v2172 = vand.u32 %v706, 4294901760
      %2173 = vmatmul.mubr.f32.gmra.mrb[0].mxu0 %v2172
      %v2174 = vpop.f32.mrb[0].mxu0
      %v2175 = vadd.f32 %v1848, %v2174
      %v2176 = vpop.f32.mrb[0].mxu0
      %2177 = vmatprep.mubr.f32.mxu0 0.0
      %v2178 = vand.u32 %v709, 4294901760
      %2179 = vmatmul.mubr.f32.gmra.mrb[0].mxu0 %v2178
      %v2180 = vpop.f32.mrb[0].mxu0
      %v2181 = vadd.f32 %v1856, %v2180
      %v2182 = vpop.f32.mrb[0].mxu0
      %2183 = vmatprep.mubr.f32.mxu0 0.0
      %v2184 = vand.u32 %v712, 4294901760
      %2185 = vmatmul.mubr.f32.gmra.mrb[0].mxu0 %v2184
      %v2186 = vpop.f32.mrb[0].mxu0
      %v2187 = vadd.f32 %v1864, %v2186
      %v2188 = vpop.f32.mrb[0].mxu0
      %2189 = vmatprep.mubr.f32.mxu0 0.0
      %v2190 = vand.u32 %v715, 4294901760
      %2191 = vmatmul.mubr.f32.gmra.mrb[0].mxu0 %v2190
      %v2192 = vpop.f32.mrb[0].mxu0
      %v2193 = vadd.f32 %v1872, %v2192
      %v2194 = vpop.f32.mrb[0].mxu0
      %2195 = vmatprep.mubr.f32.mxu0 0.0
      %v2196 = vand.u32 %v718, 4294901760
      %2197 = vmatmul.mubr.f32.gmra.mrb[0].mxu0 %v2196
      %v2198 = vpop.f32.mrb[0].mxu0
      %v2199 = vadd.f32 %v1880, %v2198
      %v2200 = vpop.f32.mrb[0].mxu0
      %2201 = vmatprep.mubr.f32.mxu0 0.0
      %v2202 = vand.u32 %v721, 4294901760
      %2203 = vmatmul.mubr.f32.gmra.mrb[0].mxu0 %v2202
      %v2204 = vpop.f32.mrb[0].mxu0
      %v2205 = vadd.f32 %v1888, %v2204
      %v2206 = vpop.f32.mrb[0].mxu0
      %2207 = vmatprep.mubr.f32.mxu0 0.0
      %v2208 = vand.u32 %v724, 4294901760
      %2209 = vmatmul.mubr.f32.gmra.mrb[0].mxu0 %v2208
      %v2210 = vpop.f32.mrb[0].mxu0
      %v2211 = vadd.f32 %v1896, %v2210
      %v2212 = vpop.f32.mrb[0].mxu0
      %2213 = vmatprep.mubr.f32.mxu0 0.0
      %v2214 = vand.u32 %v727, 4294901760
      %2215 = vmatmul.mubr.f32.gmra.mrb[0].mxu0 %v2214
      %v2216 = vpop.f32.mrb[0].mxu0
      %v2217 = vadd.f32 %v1904, %v2216
      %v2218 = vpop.f32.mrb[0].mxu0
      %2219 = vmatprep.mubr.f32.mxu0 0.0
      %v2220 = vand.u32 %v730, 4294901760
      %2221 = vmatmul.mubr.f32.gmra.mrb[0].mxu0 %v2220
      %v2222 = vpop.f32.mrb[0].mxu0
      %v2223 = vadd.f32 %v1912, %v2222
      %v2224 = vpop.f32.mrb[0].mxu0
      %2225 = vmatprep.mubr.f32.mxu0 0.0
      %v2226 = vand.u32 %v733, 4294901760
      %2227 = vmatmul.mubr.f32.gmra.mrb[0].mxu0 %v2226
      %v2228 = vpop.f32.mrb[0].mxu0
      %v2229 = vadd.f32 %v1920, %v2228
      %v2230 = vpop.f32.mrb[0].mxu0
      %2231 = vmatprep.mubr.f32.mxu0 0.0
      %v2232 = vand.u32 %v736, 4294901760
      %2233 = vmatmul.mubr.f32.gmra.mrb[0].mxu0 %v2232
      %v2234 = vpop.f32.mrb[0].mxu0
      %v2235 = vadd.f32 %v1928, %v2234
      %v2236 = vpop.f32.mrb[0].mxu0
      %2237 = vmatprep.mubr.f32.mxu0 0.0
      %v2238 = vand.u32 %v739, 4294901760
      %2239 = vmatmul.mubr.f32.gmra.mrb[0].mxu0 %v2238
      %v2240 = vpop.f32.mrb[0].mxu0
      %v2241 = vadd.f32 %v1936, %v2240
      %v2242 = vpop.f32.mrb[0].mxu0
      %2243 = vmatprep.mubr.f32.mxu0 0.0
      %v2244 = vand.u32 %v742, 4294901760
      %2245 = vmatmul.mubr.f32.gmra.mrb[0].mxu0 %v2244
      %v2246 = vpop.f32.mrb[0].mxu0
      %v2247 = vadd.f32 %v1944, %v2246
      %v2248 = vpop.f32.mrb[0].mxu0
      %2249 = vmatprep.mubr.f32.mxu0 0.0
      %v2250 = vand.u32 %v745, 4294901760
      %2251 = vmatmul.mubr.f32.gmra.mrb[0].mxu0 %v2250
      %v2252 = vpop.f32.mrb[0].mxu0
      %v2253 = vadd.f32 %v1952, %v2252
      %v2254 = vpop.f32.mrb[0].mxu0
      %2255 = vmatprep.mubr.f32.mxu0 0.0
      %v2256 = vand.u32 %v748, 4294901760
      %2257 = vmatmul.mubr.f32.gmra.mrb[0].mxu0 %v2256
      %v2258 = vpop.f32.mrb[0].mxu0
      %v2259 = vadd.f32 %v1960, %v2258
      %v2260 = vpop.f32.mrb[0].mxu0
      %2261 = vmatprep.mubr.f32.mxu0 0.0
      %v2262 = vand.u32 %v751, 4294901760
      %2263 = vmatmul.mubr.f32.gmra.mrb[0].mxu0 %v2262
      %v2264 = vpop.f32.mrb[0].mxu0
      %v2265 = vadd.f32 %v1968, %v2264
      %v2266 = vpop.f32.mrb[0].mxu0
      %2267 = vmatprep.mubr.f32.mxu0 0.0
      %v2268 = vand.u32 %v754, 4294901760
      %2269 = vmatmul.mubr.f32.gmra.mrb[0].mxu0 %v2268
      %v2270 = vpop.f32.mrb[0].mxu0
      %v2271 = vadd.f32 %v1976, %v2270
      %v2272 = vpop.f32.mrb[0].mxu0
      %2273 = vmatprep.mubr.f32.mxu0 0.0
      %v2274 = vand.u32 %v757, 4294901760
      %2275 = vmatmul.mubr.f32.gmra.mrb[0].mxu0 %v2274
      %v2276 = vpop.f32.mrb[0].mxu0
      %v2277 = vadd.f32 %v1984, %v2276
      %v2278 = vpop.f32.mrb[0].mxu0
      %2279 = vmatprep.mubr.f32.mxu0 0.0
      %v2280 = vand.u32 %v760, 4294901760
      %2281 = vmatmul.mubr.f32.gmra.mrb[0].mxu0 %v2280
      %v2282 = vpop.f32.mrb[0].mxu0
      %v2283 = vadd.f32 %v1992, %v2282
      %v2284 = vpop.f32.mrb[0].mxu0
      %2285 = vmatprep.mubr.f32.mxu0 0.0
      %v2286 = vand.u32 %v763, 4294901760
      %2287 = vmatmul.mubr.f32.gmra.mrb[0].mxu0 %v2286
      %v2288 = vpop.f32.mrb[0].mxu0
      %v2289 = vadd.f32 %v2000, %v2288
      %v2290 = vpop.f32.mrb[0].mxu0
      %2291 = vmatprep.mubr.f32.mxu0 0.0
      %v2292 = vand.u32 %v766, 4294901760
      %2293 = vmatmul.mubr.f32.gmra.mrb[0].mxu0 %v2292
      %v2294 = vpop.f32.mrb[0].mxu0
      %v2295 = vadd.f32 %v2008, %v2294
      %v2296 = vpop.f32.mrb[0].mxu0
      %2297 = vmatprep.mubr.f32.mxu0 0.0
      %v2298 = vand.u32 %v769, 4294901760
      %2299 = vmatmul.mubr.f32.gmra.mrb[0].mxu0 %v2298
      %v2300 = vpop.f32.mrb[0].mxu0
      %v2301 = vadd.f32 %v2016, %v2300
      %v2302 = vpop.f32.mrb[0].mxu0
      %2303 = vmatprep.mubr.f32.mxu0 0.0
      %v2304 = vand.u32 %v772, 4294901760
      %2305 = vmatmul.mubr.f32.gmra.mrb[0].mxu0 %v2304
      %v2306 = vpop.f32.mrb[0].mxu0
      %v2307 = vadd.f32 %v2024, %v2306
      %v2308 = vpop.f32.mrb[0].mxu0
      %2309 = vmatprep.mubr.f32.mxu0 0.0
      %v2310 = vand.u32 %v775, 4294901760
      %2311 = vmatmul.mubr.f32.gmra.mrb[0].mxu0 %v2310
      %v2312 = vpop.f32.mrb[0].mxu0
      %v2313 = vadd.f32 %v2032, %v2312
      %v2314 = vpop.f32.mrb[0].mxu0
      %2315 = vmatprep.mubr.f32.mxu0 0.0
      %v2316 = vand.u32 %v778, 4294901760
      %2317 = vmatmul.mubr.f32.gmra.mrb[0].mxu0 %v2316
      %v2318 = vpop.f32.mrb[0].mxu0
      %v2319 = vadd.f32 %v2040, %v2318
      %v2320 = vpop.f32.mrb[0].mxu0
      %2321 = vmatprep.mubr.f32.mxu0 0.0
      %v2322 = vand.u32 %v781, 4294901760
      %2323 = vmatmul.mubr.f32.gmra.mrb[0].mxu0 %v2322
      %v2324 = vpop.f32.mrb[0].mxu0
      %v2325 = vadd.f32 %v2048, %v2324
      %v2326 = vpop.f32.mrb[0].mxu0
      %2327 = vmatprep.mubr.f32.mxu0 0.0
      %v2328 = vand.u32 %v784, 4294901760
      %2329 = vmatmul.mubr.f32.gmra.mrb[0].mxu0 %v2328
      %v2330 = vpop.f32.mrb[0].mxu0
      %v2331 = vadd.f32 %v2056, %v2330
      %v2332 = vpop.f32.mrb[0].mxu0
      %2333 = vmatprep.mubr.f32.mxu0 0.0
      %v2334 = vand.u32 %v787, 4294901760
      %2335 = vmatmul.mubr.f32.gmra.mrb[0].mxu0 %v2334
      %v2336 = vpop.f32.mrb[0].mxu0
      %v2337 = vadd.f32 %v2064, %v2336
      %v2338 = vpop.f32.mrb[0].mxu0
      %2339 = vmatprep.mubr.f32.mxu0 0.0
      %v2340 = vand.u32 %v790, 4294901760
      %2341 = vmatmul.mubr.f32.gmra.mrb[0].mxu0 %v2340
      %v2342 = vpop.f32.mrb[0].mxu0
      %v2343 = vadd.f32 %v2072, %v2342
      %v2344 = vpop.f32.mrb[0].mxu0
      %2345 = vmatprep.mubr.f32.mxu0 0.0
      %v2346 = vand.u32 %v793, 4294901760
      %2347 = vmatmul.mubr.f32.gmra.mrb[0].mxu0 %v2346
      %v2348 = vpop.f32.mrb[0].mxu0
      %v2349 = vadd.f32 %v2080, %v2348
      %v2350 = vpop.f32.mrb[0].mxu0
      %2351 = vdwg.mxu0
      %2352 = vmatprep.subr.mxu0 0.0
      %v2353 = vand.u32 %v688, 4294901760
      %2354 = vmatpush1.msra.mxu0 %v2353
      %2355 = vmatprep.subr.mxu0 0.0
      %v2356 = vand.u32 %v689, 4294901760
      %2357 = vmatpush1.msra.mxu0 %v2356
      %2358 = vmatprep.subr.mxu0 0.0
      %v2359 = vand.u32 %v690, 4294901760
      %2360 = vmatpush1.msra.mxu0 %v2359
      %2361 = vmatprep.subr.mxu0 0.0
      %v2362 = vand.u32 %v691, 4294901760
      %2363 = vmatpush1.msra.mxu0 %v2362
      %2364 = vmatprep.subr.mxu0 0.0
      %2365 = vmatpush1.msra.mxu0 0.0
      %2366 = vmatprep.subr.mxu0 0.0
      %2367 = vmatpush1.msra.mxu0 0.0
      %2368 = vmatprep.subr.mxu0 0.0
      %2369 = vmatpush1.msra.mxu0 0.0
      %2370 = vmatprep.subr.mxu0 0.0
      %2371 = vmatpush1.msra.mxu0 0.0
      %2372 = vmatprep.subr.mxu0 0.0
      %2373 = vmatpush1.msra.mxu0 0.0
      %2374 = vmatprep.subr.mxu0 0.0
      %2375 = vmatpush1.msra.mxu0 0.0
      %2376 = vmatprep.subr.mxu0 0.0
      %2377 = vmatpush1.msra.mxu0 0.0
      %2378 = vmatprep.subr.mxu0 0.0
      %2379 = vmatpush1.msra.mxu0 0.0
      %2380 = vmatprep.subr.mxu0 0.0
      %2381 = vmatpush1.msra.mxu0 0.0
      %2382 = vmatprep.subr.mxu0 0.0
      %2383 = vmatpush1.msra.mxu0 0.0
      %2384 = vmatprep.subr.mxu0 0.0
      %2385 = vmatpush1.msra.mxu0 0.0
      %2386 = vmatprep.subr.mxu0 0.0
      %2387 = vmatpush1.msra.mxu0 0.0
      %2388 = vmatprep.subr.mxu0 0.0
      %2389 = vmatpush1.msra.mxu0 0.0
      %2390 = vmatprep.subr.mxu0 0.0
      %2391 = vmatpush1.msra.mxu0 0.0
      %2392 = vmatprep.subr.mxu0 0.0
      %2393 = vmatpush1.msra.mxu0 0.0
      %2394 = vmatprep.subr.mxu0 0.0
      %2395 = vmatpush1.msra.mxu0 0.0
      %2396 = vmatprep.subr.mxu0 0.0
      %2397 = vmatpush1.msra.mxu0 0.0
      %2398 = vmatprep.subr.mxu0 0.0
      %2399 = vmatpush1.msra.mxu0 0.0
      %2400 = vmatprep.subr.mxu0 0.0
      %2401 = vmatpush1.msra.mxu0 0.0
      %2402 = vmatprep.subr.mxu0 0.0
      %2403 = vmatpush1.msra.mxu0 0.0
      %2404 = vmatprep.subr.mxu0 0.0
      %2405 = vmatpush1.msra.mxu0 0.0
      %2406 = vmatprep.subr.mxu0 0.0
      %2407 = vmatpush1.msra.mxu0 0.0
      %2408 = vmatprep.subr.mxu0 0.0
      %2409 = vmatpush1.msra.mxu0 0.0
      %2410 = vmatprep.subr.mxu0 0.0
      %2411 = vmatpush1.msra.mxu0 0.0
      %2412 = vmatprep.subr.mxu0 0.0
      %2413 = vmatpush1.msra.mxu0 0.0
      %2414 = vmatprep.subr.mxu0 0.0
      %2415 = vmatpush1.msra.mxu0 0.0
      %2416 = vmatprep.subr.mxu0 0.0
      %2417 = vmatpush1.msra.mxu0 0.0
      %2418 = vmatprep.subr.mxu0 0.0
      %2419 = vmatpush1.msra.mxu0 0.0
      %2420 = vmatprep.mubr.f32.mxu0 0.0
      %v2421 = vand.u32 %v700, 4294901760
      %2422 = vmatmul.mubr.f32.gmra.mrb[0].mxu0 %v2421
      %v2423 = vpop.f32.mrb[0].mxu0
      %v2424 = vadd.f32 %v2163, %v2423
      %v2425 = vpop.f32.mrb[0].mxu0
      %2426 = vmatprep.mubr.f32.mxu0 0.0
      %v2427 = vand.u32 %v703, 4294901760
      %2428 = vmatmul.mubr.f32.gmra.mrb[0].mxu0 %v2427
      %v2429 = vpop.f32.mrb[0].mxu0
      %v2430 = vadd.f32 %v2169, %v2429
      %v2431 = vpop.f32.mrb[0].mxu0
      %2432 = vmatprep.mubr.f32.mxu0 0.0
      %v2433 = vand.u32 %v706, 4294901760
      %2434 = vmatmul.mubr.f32.gmra.mrb[0].mxu0 %v2433
      %v2435 = vpop.f32.mrb[0].mxu0
      %v2436 = vadd.f32 %v2175, %v2435
      %v2437 = vpop.f32.mrb[0].mxu0
      %2438 = vmatprep.mubr.f32.mxu0 0.0
      %v2439 = vand.u32 %v709, 4294901760
      %2440 = vmatmul.mubr.f32.gmra.mrb[0].mxu0 %v2439
      %v2441 = vpop.f32.mrb[0].mxu0
      %v2442 = vadd.f32 %v2181, %v2441
      %v2443 = vpop.f32.mrb[0].mxu0
      %2444 = vmatprep.mubr.f32.mxu0 0.0
      %v2445 = vand.u32 %v712, 4294901760
      %2446 = vmatmul.mubr.f32.gmra.mrb[0].mxu0 %v2445
      %v2447 = vpop.f32.mrb[0].mxu0
      %v2448 = vadd.f32 %v2187, %v2447
      %v2449 = vpop.f32.mrb[0].mxu0
      %2450 = vmatprep.mubr.f32.mxu0 0.0
      %v2451 = vand.u32 %v715, 4294901760
      %2452 = vmatmul.mubr.f32.gmra.mrb[0].mxu0 %v2451
      %v2453 = vpop.f32.mrb[0].mxu0
      %v2454 = vadd.f32 %v2193, %v2453
      %v2455 = vpop.f32.mrb[0].mxu0
      %2456 = vmatprep.mubr.f32.mxu0 0.0
      %v2457 = vand.u32 %v718, 4294901760
      %2458 = vmatmul.mubr.f32.gmra.mrb[0].mxu0 %v2457
      %v2459 = vpop.f32.mrb[0].mxu0
      %v2460 = vadd.f32 %v2199, %v2459
      %v2461 = vpop.f32.mrb[0].mxu0
      %2462 = vmatprep.mubr.f32.mxu0 0.0
      %v2463 = vand.u32 %v721, 4294901760
      %2464 = vmatmul.mubr.f32.gmra.mrb[0].mxu0 %v2463
      %v2465 = vpop.f32.mrb[0].mxu0
      %v2466 = vadd.f32 %v2205, %v2465
      %v2467 = vpop.f32.mrb[0].mxu0
      %2468 = vmatprep.mubr.f32.mxu0 0.0
      %v2469 = vand.u32 %v724, 4294901760
      %2470 = vmatmul.mubr.f32.gmra.mrb[0].mxu0 %v2469
      %v2471 = vpop.f32.mrb[0].mxu0
      %v2472 = vadd.f32 %v2211, %v2471
      %v2473 = vpop.f32.mrb[0].mxu0
      %2474 = vmatprep.mubr.f32.mxu0 0.0
      %v2475 = vand.u32 %v727, 4294901760
      %2476 = vmatmul.mubr.f32.gmra.mrb[0].mxu0 %v2475
      %v2477 = vpop.f32.mrb[0].mxu0
      %v2478 = vadd.f32 %v2217, %v2477
      %v2479 = vpop.f32.mrb[0].mxu0
      %2480 = vmatprep.mubr.f32.mxu0 0.0
      %v2481 = vand.u32 %v730, 4294901760
      %2482 = vmatmul.mubr.f32.gmra.mrb[0].mxu0 %v2481
      %v2483 = vpop.f32.mrb[0].mxu0
      %v2484 = vadd.f32 %v2223, %v2483
      %v2485 = vpop.f32.mrb[0].mxu0
      %2486 = vmatprep.mubr.f32.mxu0 0.0
      %v2487 = vand.u32 %v733, 4294901760
      %2488 = vmatmul.mubr.f32.gmra.mrb[0].mxu0 %v2487
      %v2489 = vpop.f32.mrb[0].mxu0
      %v2490 = vadd.f32 %v2229, %v2489
      %v2491 = vpop.f32.mrb[0].mxu0
      %2492 = vmatprep.mubr.f32.mxu0 0.0
      %v2493 = vand.u32 %v736, 4294901760
      %2494 = vmatmul.mubr.f32.gmra.mrb[0].mxu0 %v2493
      %v2495 = vpop.f32.mrb[0].mxu0
      %v2496 = vadd.f32 %v2235, %v2495
      %v2497 = vpop.f32.mrb[0].mxu0
      %2498 = vmatprep.mubr.f32.mxu0 0.0
      %v2499 = vand.u32 %v739, 4294901760
      %2500 = vmatmul.mubr.f32.gmra.mrb[0].mxu0 %v2499
      %v2501 = vpop.f32.mrb[0].mxu0
      %v2502 = vadd.f32 %v2241, %v2501
      %v2503 = vpop.f32.mrb[0].mxu0
      %2504 = vmatprep.mubr.f32.mxu0 0.0
      %v2505 = vand.u32 %v742, 4294901760
      %2506 = vmatmul.mubr.f32.gmra.mrb[0].mxu0 %v2505
      %v2507 = vpop.f32.mrb[0].mxu0
      %v2508 = vadd.f32 %v2247, %v2507
      %v2509 = vpop.f32.mrb[0].mxu0
      %2510 = vmatprep.mubr.f32.mxu0 0.0
      %v2511 = vand.u32 %v745, 4294901760
      %2512 = vmatmul.mubr.f32.gmra.mrb[0].mxu0 %v2511
      %v2513 = vpop.f32.mrb[0].mxu0
      %v2514 = vadd.f32 %v2253, %v2513
      %v2515 = vpop.f32.mrb[0].mxu0
      %2516 = vmatprep.mubr.f32.mxu0 0.0
      %v2517 = vand.u32 %v748, 4294901760
      %2518 = vmatmul.mubr.f32.gmra.mrb[0].mxu0 %v2517
      %v2519 = vpop.f32.mrb[0].mxu0
      %v2520 = vadd.f32 %v2259, %v2519
      %v2521 = vpop.f32.mrb[0].mxu0
      %2522 = vmatprep.mubr.f32.mxu0 0.0
      %v2523 = vand.u32 %v751, 4294901760
      %2524 = vmatmul.mubr.f32.gmra.mrb[0].mxu0 %v2523
      %v2525 = vpop.f32.mrb[0].mxu0
      %v2526 = vadd.f32 %v2265, %v2525
      %v2527 = vpop.f32.mrb[0].mxu0
      %2528 = vmatprep.mubr.f32.mxu0 0.0
      %v2529 = vand.u32 %v754, 4294901760
      %2530 = vmatmul.mubr.f32.gmra.mrb[0].mxu0 %v2529
      %v2531 = vpop.f32.mrb[0].mxu0
      %v2532 = vadd.f32 %v2271, %v2531
      %v2533 = vpop.f32.mrb[0].mxu0
      %2534 = vmatprep.mubr.f32.mxu0 0.0
      %v2535 = vand.u32 %v757, 4294901760
      %2536 = vmatmul.mubr.f32.gmra.mrb[0].mxu0 %v2535
      %v2537 = vpop.f32.mrb[0].mxu0
      %v2538 = vadd.f32 %v2277, %v2537
      %v2539 = vpop.f32.mrb[0].mxu0
      %2540 = vmatprep.mubr.f32.mxu0 0.0
      %v2541 = vand.u32 %v760, 4294901760
      %2542 = vmatmul.mubr.f32.gmra.mrb[0].mxu0 %v2541
      %v2543 = vpop.f32.mrb[0].mxu0
      %v2544 = vadd.f32 %v2283, %v2543
      %v2545 = vpop.f32.mrb[0].mxu0
      %2546 = vmatprep.mubr.f32.mxu0 0.0
      %v2547 = vand.u32 %v763, 4294901760
      %2548 = vmatmul.mubr.f32.gmra.mrb[0].mxu0 %v2547
      %v2549 = vpop.f32.mrb[0].mxu0
      %v2550 = vadd.f32 %v2289, %v2549
      %v2551 = vpop.f32.mrb[0].mxu0
      %2552 = vmatprep.mubr.f32.mxu0 0.0
      %v2553 = vand.u32 %v766, 4294901760
      %2554 = vmatmul.mubr.f32.gmra.mrb[0].mxu0 %v2553
      %v2555 = vpop.f32.mrb[0].mxu0
      %v2556 = vadd.f32 %v2295, %v2555
      %v2557 = vpop.f32.mrb[0].mxu0
      %2558 = vmatprep.mubr.f32.mxu0 0.0
      %v2559 = vand.u32 %v769, 4294901760
      %2560 = vmatmul.mubr.f32.gmra.mrb[0].mxu0 %v2559
      %v2561 = vpop.f32.mrb[0].mxu0
      %v2562 = vadd.f32 %v2301, %v2561
      %v2563 = vpop.f32.mrb[0].mxu0
      %2564 = vmatprep.mubr.f32.mxu0 0.0
      %v2565 = vand.u32 %v772, 4294901760
      %2566 = vmatmul.mubr.f32.gmra.mrb[0].mxu0 %v2565
      %v2567 = vpop.f32.mrb[0].mxu0
      %v2568 = vadd.f32 %v2307, %v2567
      %v2569 = vpop.f32.mrb[0].mxu0
      %2570 = vmatprep.mubr.f32.mxu0 0.0
      %v2571 = vand.u32 %v775, 4294901760
      %2572 = vmatmul.mubr.f32.gmra.mrb[0].mxu0 %v2571
      %v2573 = vpop.f32.mrb[0].mxu0
      %v2574 = vadd.f32 %v2313, %v2573
      %v2575 = vpop.f32.mrb[0].mxu0
      %2576 = vmatprep.mubr.f32.mxu0 0.0
      %v2577 = vand.u32 %v778, 4294901760
      %2578 = vmatmul.mubr.f32.gmra.mrb[0].mxu0 %v2577
      %v2579 = vpop.f32.mrb[0].mxu0
      %v2580 = vadd.f32 %v2319, %v2579
      %v2581 = vpop.f32.mrb[0].mxu0
      %2582 = vmatprep.mubr.f32.mxu0 0.0
      %v2583 = vand.u32 %v781, 4294901760
      %2584 = vmatmul.mubr.f32.gmra.mrb[0].mxu0 %v2583
      %v2585 = vpop.f32.mrb[0].mxu0
      %v2586 = vadd.f32 %v2325, %v2585
      %v2587 = vpop.f32.mrb[0].mxu0
      %2588 = vmatprep.mubr.f32.mxu0 0.0
      %v2589 = vand.u32 %v784, 4294901760
      %2590 = vmatmul.mubr.f32.gmra.mrb[0].mxu0 %v2589
      %v2591 = vpop.f32.mrb[0].mxu0
      %v2592 = vadd.f32 %v2331, %v2591
      %v2593 = vpop.f32.mrb[0].mxu0
      %2594 = vmatprep.mubr.f32.mxu0 0.0
      %v2595 = vand.u32 %v787, 4294901760
      %2596 = vmatmul.mubr.f32.gmra.mrb[0].mxu0 %v2595
      %v2597 = vpop.f32.mrb[0].mxu0
      %v2598 = vadd.f32 %v2337, %v2597
      %v2599 = vpop.f32.mrb[0].mxu0
      %2600 = vmatprep.mubr.f32.mxu0 0.0
      %v2601 = vand.u32 %v790, 4294901760
      %2602 = vmatmul.mubr.f32.gmra.mrb[0].mxu0 %v2601
      %v2603 = vpop.f32.mrb[0].mxu0
      %v2604 = vadd.f32 %v2343, %v2603
      %v2605 = vpop.f32.mrb[0].mxu0
      %2606 = vmatprep.mubr.f32.mxu0 0.0
      %v2607 = vand.u32 %v793, 4294901760
      %2608 = vmatmul.mubr.f32.gmra.mrb[0].mxu0 %v2607
      %v2609 = vpop.f32.mrb[0].mxu0
      %v2610 = vadd.f32 %v2349, %v2609
      %v2611 = vpop.f32.mrb[0].mxu0
      %2612 = vdwg.mxu0
      %vm2613 = vcmask 785408
      %2614 = vst.msk [vmem:[%s172] sm:$0xff] %vm2613, %v2424
      %2615 = vst.msk [vmem:[%s172 + $0x8] sm:$0xff] %vm2613, %v2430
      %2616 = vst.msk [vmem:[%s172 + $0x10] sm:$0xff] %vm2613, %v2436
      %2617 = vst.msk [vmem:[%s172 + $0x18] sm:$0xff] %vm2613, %v2442
      %2618 = vst.msk [vmem:[%s172 + $0x20] sm:$0xff] %vm2613, %v2448
      %2619 = vst.msk [vmem:[%s172 + $0x28] sm:$0xff] %vm2613, %v2454
      %2620 = vst.msk [vmem:[%s172 + $0x30] sm:$0xff] %vm2613, %v2460
      %2621 = vst.msk [vmem:[%s172 + $0x38] sm:$0xff] %vm2613, %v2466
      %2622 = vst.msk [vmem:[%s172 + $0x40] sm:$0xff] %vm2613, %v2472
      %2623 = vst.msk [vmem:[%s172 + $0x48] sm:$0xff] %vm2613, %v2478
      %2624 = vst.msk [vmem:[%s172 + $0x50] sm:$0xff] %vm2613, %v2484
      %2625 = vst.msk [vmem:[%s172 + $0x58] sm:$0xff] %vm2613, %v2490
      %2626 = vst.msk [vmem:[%s172 + $0x60] sm:$0xff] %vm2613, %v2496
      %2627 = vst.msk [vmem:[%s172 + $0x68] sm:$0xff] %vm2613, %v2502
      %2628 = vst.msk [vmem:[%s172 + $0x70] sm:$0xff] %vm2613, %v2508
      %2629 = vst.msk [vmem:[%s172 + $0x78] sm:$0xff] %vm2613, %v2514
      %2630 = vst.msk [vmem:[%s172 + $0x80] sm:$0xff] %vm2613, %v2520
      %2631 = vst.msk [vmem:[%s172 + $0x88] sm:$0xff] %vm2613, %v2526
      %2632 = vst.msk [vmem:[%s172 + $0x90] sm:$0xff] %vm2613, %v2532
      %2633 = vst.msk [vmem:[%s172 + $0x98] sm:$0xff] %vm2613, %v2538
      %2634 = vst.msk [vmem:[%s172 + $0xa0] sm:$0xff] %vm2613, %v2544
      %2635 = vst.msk [vmem:[%s172 + $0xa8] sm:$0xff] %vm2613, %v2550
      %2636 = vst.msk [vmem:[%s172 + $0xb0] sm:$0xff] %vm2613, %v2556
      %2637 = vst.msk [vmem:[%s172 + $0xb8] sm:$0xff] %vm2613, %v2562
      %2638 = vst.msk [vmem:[%s172 + $0xc0] sm:$0xff] %vm2613, %v2568
      %2639 = vst.msk [vmem:[%s172 + $0xc8] sm:$0xff] %vm2613, %v2574
      %2640 = vst.msk [vmem:[%s172 + $0xd0] sm:$0xff] %vm2613, %v2580
      %2641 = vst.msk [vmem:[%s172 + $0xd8] sm:$0xff] %vm2613, %v2586
      %2642 = vst.msk [vmem:[%s172 + $0xe0] sm:$0xff] %vm2613, %v2592
      %2643 = vst.msk [vmem:[%s172 + $0xe8] sm:$0xff] %vm2613, %v2598
      %2644 = vst.msk [vmem:[%s172 + $0xf0] sm:$0xff] %vm2613, %v2604
      %2645 = vst.msk [vmem:[%s172 + $0xf8] sm:$0xff] %vm2613, %v2610
      %s2646 = smul.u32 32, %s14
      %p2647 = scmp.lt.s32.totalorder %s2646, 63
      %s2648 = scalar_select %p2647, %s2646, 63
      %s2649 = smul.addr %s2648, 8
      %s2650 = scalar_lea.vmem %s3, %s2649
      // Predicated region
      $region33: #{tpu_custom_call.1} parent=31 // pred_check
        %p2651 = pneg %p100
      $region34: #{tpu_custom_call.1} parent=31 // pred_check_branch
        %2653 = sbr.rel (%p2651) target = $region36
      $region35: #{tpu_custom_call.1} parent=31 // pred_region
        %s2654 = smul.u32 32, %s14
      $region36: #{tpu_custom_call.1} parent=31 // pred_fallthru
        _
    $region32: #{tpu_custom_call.1} parent=5 // pred_fallthru
      _
    %p2655 = scmp.le.s32.totalorder 2, %s9
    // Predicated region
    $region37: #{tpu_custom_call.1} parent=5 // pred_check
      %p2656 = pneg %p2655
    $region38: #{tpu_custom_call.1} parent=5 // pred_check_branch
      %2658 = sbr.rel (%p2656) target = $region40
    $region39: #{tpu_custom_call.1} parent=5 // pred_region
      %s2659 = ssub.s32 %s9, 2
      // Predicated region
      $region41: #{tpu_custom_call.1} parent=39 // pred_check
        %p2660 = pneg %p106
      $region42: #{tpu_custom_call.1} parent=39 // pred_check_branch
        %2662 = sbr.rel (%p2660) target = $region44
      $region43: #{tpu_custom_call.1} parent=39 // pred_region
        %s2663 = smul.u32 32, %s15
        %p2664 = scmp.lt.s32.totalorder %s2663, 63
        %s2665 = scalar_select %p2664, %s2663, 63
        %s2666 = smul.addr %s2665, 8
        %s2667 = scalar_lea.vmem %s3, %s2666
      $region44: #{tpu_custom_call.1} parent=39 // pred_fallthru
        _
    $region40: #{tpu_custom_call.1} parent=5 // pred_fallthru
      _
  $region6: #{tpu_custom_call.1} parent=0 // loop_footer
    %s13 = sadd.s32 1, %s9
  $region7: #{tpu_custom_call.1} parent=0 // loop_footer_branch
    %8 = sbr.rel target = $region3
  $region8: #{tpu_custom_call.1} parent=0 // loop_exit
    _

</llo_original>
